<compile_context>
chip_gen: v7x
topology: tpu7x:2x2x1
jax: 0.10.0
libtpu: 0.0.40
codegen_flags: <defaults>
</compile_context>

<pallas_src>
import math

import jax
import jax.numpy as jnp
from jax.experimental import pallas as pl
from jax.experimental.pallas import tpu as pltpu


# ----------------------------------------------------------------------------
# Fused Pallas kernel: reduce_map + folding1 + folding2
# ----------------------------------------------------------------------------
def fused_fold_kernel(
    pf_ref, co_ref, seed_ref,
    wrm_pf, wrm_co, brm,
    w1a_s, w1a_f, b1a, w2a, b2a, w3a, b3a,
    w1b_d, w1b_f, b1b, w2b, b2b, w3b, b3b,
    out_ref,
):
    """One grid step processes TM query rows (TM*S fold points)."""
    TM = pf_ref.shape[0]
    S = seed_ref.shape[0]
    H = w2a.shape[0]
    f32, bf16 = jnp.float32, jnp.bfloat16

    # reduce_map: Linear(cat([point_feature, coarse], -1)) as split matmuls.
    feat = (
        jnp.dot(pf_ref[...], wrm_pf[...], preferred_element_type=f32)
        + jnp.dot(co_ref[...], wrm_co[...], preferred_element_type=f32)
        + brm[...]
    ).astype(bf16)                                                    # (TM, C)

    # ---- folding1 -----------------------------------------------------------
    # layer 1 split by linearity: seed part (S,H) + per-query feat part (TM,H)
    seed_h = jnp.dot(seed_ref[...], w1a_s[...], preferred_element_type=f32) + b1a[...]  # (S, H)
    feat_h = jnp.dot(feat, w1a_f[...], preferred_element_type=f32)                      # (TM, H)
    h1 = jnp.maximum(feat_h[:, None, :] + seed_h[None, :, :], 0.0)                      # (TM, S, H)
    h1 = h1.reshape(TM * S, H).astype(bf16)
    h2 = jnp.maximum(
        jnp.dot(h1, w2a[...], preferred_element_type=f32) + b2a[...], 0.0
    ).astype(bf16)                                                                       # (TM*S, H/2)
    fd1 = (jnp.dot(h2, w3a[...], preferred_element_type=f32) + b3a[...]).astype(bf16)    # (TM*S, 3)

    # ---- folding2 (consumes fd1 directly from VMEM/vregs) -------------------
    featb_h = jnp.dot(feat, w1b_f[...], preferred_element_type=f32) + b1b[...]           # (TM, H)
    fd_h = jnp.dot(fd1, w1b_d[...], preferred_element_type=f32)                          # (TM*S, H)
    g1 = jnp.maximum(fd_h.reshape(TM, S, H) + featb_h[:, None, :], 0.0)
    g1 = g1.reshape(TM * S, H).astype(bf16)
    g2 = jnp.maximum(
        jnp.dot(g1, w2b[...], preferred_element_type=f32) + b2b[...], 0.0
    ).astype(bf16)
    out_ref[...] = jnp.dot(g2, w3b[...], preferred_element_type=f32) + b3b[...]          # (TM*S, 3)


def _resident_spec(a):
    # Whole array kept resident in VMEM (constant block index across the grid).
    return pl.BlockSpec(a.shape, lambda *_: (0,) * a.ndim)


def fused_pt_tail(pf2d, co2d, seed, params, TM):
    """pf2d: (BMp, C) bf16, co2d: (BMp, 3) bf16, seed: (S, 2) bf16 -> (BMp*S, 3) f32."""
    BMp, C = pf2d.shape
    S = seed.shape[0]
    w_rm_pf, w_rm_co, b_rm = params["reduce_map"]
    f1, f2 = params["folding1"], params["folding2"]
    H = f1["w2"].shape[0]
    Hh = H // 2
    n_rows = BMp * S

    weights = [
        w_rm_pf, w_rm_co, b_rm,
        f1["w1_ext"], f1["w1_feat"], f1["b1"], f1["w2"], f1["b2"], f1["w3"], f1["b3"],
        f2["w1_ext"], f2["w1_feat"], f2["b1"], f2["w2"], f2["b2"], f2["w3"], f2["b3"],
    ]

    in_specs = [
        pl.BlockSpec((TM, C), lambda i: (i, 0)),   # point features: row-tiled
        pl.BlockSpec((TM, 3), lambda i: (i, 0)),   # coarse xyz:     row-tiled
        _resident_spec(seed),
    ] + [_resident_spec(w) for w in weights]

    out_spec = pl.BlockSpec((TM * S, 3), lambda i: (i, 0))

    flops = int(
        2 * BMp * (C + 3) * C                      # reduce_map
        + 2 * S * 2 * H + 2 * BMp * C * H          # folding1 layer 1 (split)
        + 2 * BMp * C * H + 2 * n_rows * 3 * H     # folding2 layer 1 (split)
        + 2 * 2 * n_rows * (H * Hh + Hh * 3)       # layers 2/3 of both branches
    )
    bytes_accessed = int(
        pf2d.size * pf2d.dtype.itemsize
        + co2d.size * co2d.dtype.itemsize
        + seed.size * seed.dtype.itemsize
        + sum(int(w.size) * w.dtype.itemsize for w in weights)
        + n_rows * 3 * 4
    )

    return pl.pallas_call(
        fused_fold_kernel,
        out_shape=jax.ShapeDtypeStruct((n_rows, 3), jnp.float32),
        grid_spec=pltpu.PrefetchScalarGridSpec(
            num_scalar_prefetch=0,
            grid=(BMp // TM,),
            in_specs=in_specs,
            out_specs=out_spec,
        ),
        compiler_params=pltpu.CompilerParams(
            dimension_semantics=("parallel",),       # shards rows across TCs on v7x
            vmem_limit_bytes=32 * 1024 * 1024,
        ),
        cost_estimate=pl.CostEstimate(
            flops=flops, transcendentals=0, bytes_accessed=bytes_accessed
        ),
    )(pf2d, co2d, seed, *weights)


# ----------------------------------------------------------------------------
# Parameter construction (deterministic, synthetic) with BN folded + bf16 cast
# ----------------------------------------------------------------------------
def _fold_bn_into_conv(w, b, gamma, beta, mean, var, eps=1e-5):
    s = gamma / jnp.sqrt(var + eps)
    return w * s[None, :], (b - mean) * s + beta


def make_params(key, trans_dim, hidden_dim):
    ks = iter(jax.random.split(key, 40))
    bf16 = jnp.bfloat16

    def conv(cin, cout, scale=0.05):
        w = scale * jax.random.normal(next(ks), (cin, cout), jnp.float32)
        b = scale * jax.random.normal(next(ks), (cout,), jnp.float32)
        return w, b

    def bn(c):
        gamma = 1.0 + 0.1 * jax.random.normal(next(ks), (c,), jnp.float32)
        beta = 0.1 * jax.random.normal(next(ks), (c,), jnp.float32)
        mean = 0.1 * jax.random.normal(next(ks), (c,), jnp.float32)
        var = 1.0 + 0.1 * jax.random.uniform(next(ks), (c,), jnp.float32)
        return gamma, beta, mean, var

    params = {}

    # reduce_map: Linear(trans_dim + 3 -> trans_dim), split over
    # the [point_feature (C) ; coarse (3)] concatenation.
    w, b = conv(trans_dim + 3, trans_dim)
    params["reduce_map"] = (
        w[:trans_dim].astype(bf16),
        w[trans_dim:].astype(bf16),
        b.reshape(1, -1),
    )

    half = hidden_dim // 2

    def fold_branch(n_extra):
        w1, b1 = conv(trans_dim + n_extra, hidden_dim)
        w1, b1 = _fold_bn_into_conv(w1, b1, *bn(hidden_dim))
        w2, b2 = conv(hidden_dim, half)
        w2, b2 = _fold_bn_into_conv(w2, b2, *bn(half))
        w3, b3 = conv(half, 3)
        return dict(
            w1_ext=w1[:n_extra].astype(bf16),    # seed / fd1 rows of the first conv
            w1_feat=w1[n_extra:].astype(bf16),   # feature rows of the first conv
            b1=b1.reshape(1, -1),
            w2=w2.astype(bf16), b2=b2.reshape(1, -1),
            w3=w3.astype(bf16), b3=b3.reshape(1, -1),
        )

    params["folding1"] = fold_branch(2)   # input channels = [seed(2); feat(C)]
    params["folding2"] = fold_branch(3)   # input channels = [fd1(3);  feat(C)]
    return params


# ----------------------------------------------------------------------------
# Forward pass
# ----------------------------------------------------------------------------
def folding_seed(step):
    lin = jnp.linspace(-1.0, 1.0, step, dtype=jnp.float32)
    a = jnp.broadcast_to(lin.reshape(1, step), (step, step)).reshape(-1)  # fast axis
    b = jnp.broadcast_to(lin.reshape(step, 1), (step, step)).reshape(-1)  # slow axis
    return jnp.stack([a, b], axis=1)  # (S, 2), channel-last


def pt_model_forward(coarse, point_feature, params, fold_step, tile_queries=None):
    """coarse: (B, M, 3) f32, point_feature: (B, M, C) f32 -> (coarse, rebuild_points)."""
    B, M, _ = coarse.shape
    C = point_feature.shape[-1]
    S = fold_step * fold_step
    BM = B * M

    # Row-tile of queries: sublane aligned and TM*S a multiple of 128 so every
    # grid step's tiles/stores are (8,128)-friendly.
    lane_mult = 128 // math.gcd(S, 128)
    row_mult = 8 * lane_mult // math.gcd(8, lane_mult)
    if tile_queries is None:
        tile_queries = max(1, 2048 // S)          # ~2048 fold rows per grid step
    TM = max(row_mult, (tile_queries // row_mult) * row_mult)
    TM = min(TM, ((BM + row_mult - 1) // row_mult) * row_mult)
    BM_pad = ((BM + TM - 1) // TM) * TM

    pf2d = point_feature.reshape(BM, C).astype(jnp.bfloat16)
    co2d = coarse.reshape(BM, 3).astype(jnp.bfloat16)
    if BM_pad != BM:
        pf2d = jnp.pad(pf2d, ((0, BM_pad - BM), (0, 0)))
        co2d = jnp.pad(co2d, ((0, BM_pad - BM), (0, 0)))
    seed = folding_seed(fold_step).astype(jnp.bfloat16)

    out = fused_pt_tail(pf2d, co2d, seed, params, TM)        # (BM_pad*S, 3) f32
    rebuild_points = out[: BM * S].reshape(B, M * S, 3)
    return coarse, rebuild_points


# Pure-JAX reference in the original concatenated form (same bf16/f32 dtype
# path as the kernel) used to validate the fused split-matmul implementation.
def reference_forward(coarse, point_feature, params, fold_step):
    B, M, _ = coarse.shape
    C = point_feature.shape[-1]
    S = fold_step * fold_step
    BM = B * M
    f32, bf16 = jnp.float32, jnp.bfloat16

    def mm(x, w):
        return jnp.dot(x.astype(bf16), w, preferred_element_type=f32)

    w_pf, w_co, b_rm = params["reduce_map"]
    x = jnp.concatenate([point_feature.reshape(BM, C), coarse.reshape(BM, 3)], axis=-1)
    feat = (mm(x, jnp.concatenate([w_pf, w_co], axis=0)) + b_rm).astype(bf16)

    seed = folding_seed(fold_step).astype(bf16)                              # (S, 2)
    seed_rows = jnp.broadcast_to(seed[None], (BM, S, 2)).reshape(BM * S, 2)
    feat_rows = jnp.broadcast_to(feat[:, None, :], (BM, S, C)).reshape(BM * S, C)

    def branch(extra_rows, p):
        w1 = jnp.concatenate([p["w1_ext"], p["w1_feat"]], axis=0)
        xcat = jnp.concatenate([extra_rows, feat_rows], axis=-1)
        h1 = jnp.maximum(mm(xcat, w1) + p["b1"], 0.0).astype(bf16)
        h2 = jnp.maximum(mm(h1, p["w2"]) + p["b2"], 0.0).astype(bf16)
        return mm(h2, p["w3"]) + p["b3"]

    fd1 = branch(seed_rows, params["folding1"])
    fd2 = branch(fd1.astype(bf16), params["folding2"])
    return coarse, fd2.reshape(B, M * S, 3)


# ----------------------------------------------------------------------------
if __name__ == "__main__":
    # Small config consistent with PT_model:
    #   trans_dim=32, num_query=8, num_pred=128 -> fold_step=4, hidden_dim=256
    B = 2
    trans_dim = 32
    num_query = 8
    num_pred = 128
    hidden_dim = 256
    fold_step = int((num_pred // num_query) ** 0.5 + 0.5)  # = 4

    key = jax.random.PRNGKey(0)
    k_param, k_coarse, k_feat = jax.random.split(key, 3)
    params = make_params(k_param, trans_dim, hidden_dim)

    # TODO(synk): PCTransformer backbone (base_model) sources were not provided;
    # its outputs (coarse query points + per-query features) are synthesized.
    coarse = jax.random.normal(k_coarse, (B, num_query, 3), jnp.float32)
    point_feature = jax.random.normal(k_feat, (B, num_query, trans_dim), jnp.float32)

    # tile_queries=8 -> 2 grid steps (exercises the row tiling / index maps).
    coarse_out, rebuild_points = pt_model_forward(
        coarse, point_feature, params, fold_step, tile_queries=8
    )
    jax.block_until_ready(rebuild_points)

    _, ref_points = reference_forward(coarse, point_feature, params, fold_step)
    assert coarse_out.shape == (B, num_query, 3)
    assert rebuild_points.shape == (B, num_query * fold_step * fold_step, 3)
    err = float(jnp.max(jnp.abs(rebuild_points - ref_points)))
    assert err < 2e-3, f"max abs err {err}"

    print("KERNEL_OK")
</pallas_src>

<mosaic_0001>
module attributes {stable_mosaic.version = 11 : i64} {
  func.func @fused_fold_kernel(%arg0: i32, %arg1: memref<8x32xbf16, #tpu.memory_space<vmem>>, %arg2: memref<8x3xbf16, #tpu.memory_space<vmem>>, %arg3: memref<16x2xbf16, #tpu.memory_space<vmem>>, %arg4: memref<32x32xbf16, #tpu.memory_space<vmem>>, %arg5: memref<3x32xbf16, #tpu.memory_space<vmem>>, %arg6: memref<1x32xf32, #tpu.memory_space<vmem>>, %arg7: memref<2x256xbf16, #tpu.memory_space<vmem>>, %arg8: memref<32x256xbf16, #tpu.memory_space<vmem>>, %arg9: memref<1x256xf32, #tpu.memory_space<vmem>>, %arg10: memref<256x128xbf16, #tpu.memory_space<vmem>>, %arg11: memref<1x128xf32, #tpu.memory_space<vmem>>, %arg12: memref<128x3xbf16, #tpu.memory_space<vmem>>, %arg13: memref<1x3xf32, #tpu.memory_space<vmem>>, %arg14: memref<3x256xbf16, #tpu.memory_space<vmem>>, %arg15: memref<32x256xbf16, #tpu.memory_space<vmem>>, %arg16: memref<1x256xf32, #tpu.memory_space<vmem>>, %arg17: memref<256x128xbf16, #tpu.memory_space<vmem>>, %arg18: memref<1x128xf32, #tpu.memory_space<vmem>>, %arg19: memref<128x3xbf16, #tpu.memory_space<vmem>>, %arg20: memref<1x3xf32, #tpu.memory_space<vmem>>, %arg21: memref<128x3xf32, #tpu.memory_space<vmem>>) attributes {dimension_semantics = [#tpu.dimension_semantics<parallel>], iteration_bounds = array<i64: 2>, scalar_prefetch = 0 : i64, scratch_operands = 0 : i64, tpu.core_type = #tpu.core_type<tc>, window_params = [{transform_indices = @transform_0, window_bounds = array<i64: 8, 32>}, {transform_indices = @transform_1, window_bounds = array<i64: 8, 3>}, {pipeline_mode = #tpu.pipeline_mode<synchronous>, transform_indices = @transform_2, window_bounds = array<i64: 16, 2>}, {pipeline_mode = #tpu.pipeline_mode<synchronous>, transform_indices = @transform_3, window_bounds = array<i64: 32, 32>}, {pipeline_mode = #tpu.pipeline_mode<synchronous>, transform_indices = @transform_4, window_bounds = array<i64: 3, 32>}, {pipeline_mode = #tpu.pipeline_mode<synchronous>, transform_indices = @transform_5, window_bounds = array<i64: 1, 32>}, {pipeline_mode = #tpu.pipeline_mode<synchronous>, transform_indices = @transform_6, window_bounds = array<i64: 2, 256>}, {pipeline_mode = #tpu.pipeline_mode<synchronous>, transform_indices = @transform_7, window_bounds = array<i64: 32, 256>}, {pipeline_mode = #tpu.pipeline_mode<synchronous>, transform_indices = @transform_8, window_bounds = array<i64: 1, 256>}, {pipeline_mode = #tpu.pipeline_mode<synchronous>, transform_indices = @transform_9, window_bounds = array<i64: 256, 128>}, {pipeline_mode = #tpu.pipeline_mode<synchronous>, transform_indices = @transform_10, window_bounds = array<i64: 1, 128>}, {pipeline_mode = #tpu.pipeline_mode<synchronous>, transform_indices = @transform_11, window_bounds = array<i64: 128, 3>}, {pipeline_mode = #tpu.pipeline_mode<synchronous>, transform_indices = @transform_12, window_bounds = array<i64: 1, 3>}, {pipeline_mode = #tpu.pipeline_mode<synchronous>, transform_indices = @transform_13, window_bounds = array<i64: 3, 256>}, {pipeline_mode = #tpu.pipeline_mode<synchronous>, transform_indices = @transform_14, window_bounds = array<i64: 32, 256>}, {pipeline_mode = #tpu.pipeline_mode<synchronous>, transform_indices = @transform_15, window_bounds = array<i64: 1, 256>}, {pipeline_mode = #tpu.pipeline_mode<synchronous>, transform_indices = @transform_16, window_bounds = array<i64: 256, 128>}, {pipeline_mode = #tpu.pipeline_mode<synchronous>, transform_indices = @transform_17, window_bounds = array<i64: 1, 128>}, {pipeline_mode = #tpu.pipeline_mode<synchronous>, transform_indices = @transform_18, window_bounds = array<i64: 128, 3>}, {pipeline_mode = #tpu.pipeline_mode<synchronous>, transform_indices = @transform_19, window_bounds = array<i64: 1, 3>}, {transform_indices = @transform_20, window_bounds = array<i64: 128, 3>}]} {
    %c0 = arith.constant 0 : index
    %c0_0 = arith.constant 0 : index
    %0 = vector.load %arg1[%c0, %c0_0] : memref<8x32xbf16, #tpu.memory_space<vmem>>, vector<8x32xbf16>
    %c0_1 = arith.constant 0 : index
    %c0_2 = arith.constant 0 : index
    %1 = vector.load %arg4[%c0_1, %c0_2] : memref<32x32xbf16, #tpu.memory_space<vmem>>, vector<32x32xbf16>
    %cst = arith.constant dense<0.000000e+00> : vector<8x32xf32>
    %2 = tpu.matmul %0, %1, %cst {dimension_numbers = #tpu.dot_dimension_numbers<[1], [0], [0], [1], [0, 0, 1, 1], [], []>} : vector<8x32xbf16>, vector<32x32xbf16>, vector<8x32xf32> -> vector<8x32xf32>
    %c0_3 = arith.constant 0 : index
    %c0_4 = arith.constant 0 : index
    %3 = vector.load %arg2[%c0_3, %c0_4] : memref<8x3xbf16, #tpu.memory_space<vmem>>, vector<8x3xbf16>
    %c0_5 = arith.constant 0 : index
    %c0_6 = arith.constant 0 : index
    %4 = vector.load %arg5[%c0_5, %c0_6] : memref<3x32xbf16, #tpu.memory_space<vmem>>, vector<3x32xbf16>
    %cst_7 = arith.constant dense<0.000000e+00> : vector<8x32xf32>
    %5 = tpu.matmul %3, %4, %cst_7 {dimension_numbers = #tpu.dot_dimension_numbers<[1], [0], [0], [1], [0, 0, 1, 1], [], []>} : vector<8x3xbf16>, vector<3x32xbf16>, vector<8x32xf32> -> vector<8x32xf32>
    %6 = arith.addf %2, %5 : vector<8x32xf32>
    %c0_8 = arith.constant 0 : index
    %c0_9 = arith.constant 0 : index
    %7 = vector.load %arg6[%c0_8, %c0_9] : memref<1x32xf32, #tpu.memory_space<vmem>>, vector<1x32xf32>
    %8 = vector.broadcast %7 : vector<1x32xf32> to vector<8x32xf32>
    %9 = arith.addf %6, %8 : vector<8x32xf32>
    %10 = arith.truncf %9 : vector<8x32xf32> to vector<8x32xbf16>
    %c0_10 = arith.constant 0 : index
    %c0_11 = arith.constant 0 : index
    %11 = vector.load %arg3[%c0_10, %c0_11] : memref<16x2xbf16, #tpu.memory_space<vmem>>, vector<16x2xbf16>
    %c0_12 = arith.constant 0 : index
    %c0_13 = arith.constant 0 : index
    %12 = vector.load %arg7[%c0_12, %c0_13] : memref<2x256xbf16, #tpu.memory_space<vmem>>, vector<2x256xbf16>
    %cst_14 = arith.constant dense<0.000000e+00> : vector<16x256xf32>
    %13 = tpu.matmul %11, %12, %cst_14 {dimension_numbers = #tpu.dot_dimension_numbers<[1], [0], [0], [1], [0, 0, 1, 1], [], []>} : vector<16x2xbf16>, vector<2x256xbf16>, vector<16x256xf32> -> vector<16x256xf32>
    %c0_15 = arith.constant 0 : index
    %c0_16 = arith.constant 0 : index
    %14 = vector.load %arg9[%c0_15, %c0_16] : memref<1x256xf32, #tpu.memory_space<vmem>>, vector<1x256xf32>
    %15 = vector.broadcast %14 : vector<1x256xf32> to vector<16x256xf32>
    %16 = arith.addf %13, %15 : vector<16x256xf32>
    %c0_17 = arith.constant 0 : index
    %c0_18 = arith.constant 0 : index
    %17 = vector.load %arg8[%c0_17, %c0_18] : memref<32x256xbf16, #tpu.memory_space<vmem>>, vector<32x256xbf16>
    %cst_19 = arith.constant dense<0.000000e+00> : vector<8x256xf32>
    %18 = tpu.matmul %10, %17, %cst_19 {dimension_numbers = #tpu.dot_dimension_numbers<[1], [0], [0], [1], [0, 0, 1, 1], [], []>} : vector<8x32xbf16>, vector<32x256xbf16>, vector<8x256xf32> -> vector<8x256xf32>
    %19 = vector.shape_cast %18 : vector<8x256xf32> to vector<8x1x256xf32>
    %20 = vector.shape_cast %16 : vector<16x256xf32> to vector<1x16x256xf32>
    %21 = vector.broadcast %19 : vector<8x1x256xf32> to vector<8x16x256xf32>
    %22 = vector.broadcast %20 : vector<1x16x256xf32> to vector<8x16x256xf32>
    %23 = arith.addf %21, %22 : vector<8x16x256xf32>
    %cst_20 = arith.constant 0.000000e+00 : f32
    %24 = vector.broadcast %cst_20 : f32 to vector<8x16x256xf32>
    %25 = arith.maximumf %23, %24 : vector<8x16x256xf32>
    %26 = vector.shape_cast %25 : vector<8x16x256xf32> to vector<128x256xf32>
    %27 = arith.truncf %26 : vector<128x256xf32> to vector<128x256xbf16>
    %c0_21 = arith.constant 0 : index
    %c0_22 = arith.constant 0 : index
    %28 = vector.load %arg10[%c0_21, %c0_22] : memref<256x128xbf16, #tpu.memory_space<vmem>>, vector<256x128xbf16>
    %cst_23 = arith.constant dense<0.000000e+00> : vector<128x128xf32>
    %29 = tpu.matmul %27, %28, %cst_23 {dimension_numbers = #tpu.dot_dimension_numbers<[1], [0], [0], [1], [0, 0, 1, 1], [], []>} : vector<128x256xbf16>, vector<256x128xbf16>, vector<128x128xf32> -> vector<128x128xf32>
    %c0_24 = arith.constant 0 : index
    %c0_25 = arith.constant 0 : index
    %30 = vector.load %arg11[%c0_24, %c0_25] : memref<1x128xf32, #tpu.memory_space<vmem>>, vector<1x128xf32>
    %31 = vector.broadcast %30 : vector<1x128xf32> to vector<128x128xf32>
    %32 = arith.addf %29, %31 : vector<128x128xf32>
    %cst_26 = arith.constant 0.000000e+00 : f32
    %33 = vector.broadcast %cst_26 : f32 to vector<128x128xf32>
    %34 = arith.maximumf %32, %33 : vector<128x128xf32>
    %35 = arith.truncf %34 : vector<128x128xf32> to vector<128x128xbf16>
    %c0_27 = arith.constant 0 : index
    %c0_28 = arith.constant 0 : index
    %36 = vector.load %arg12[%c0_27, %c0_28] : memref<128x3xbf16, #tpu.memory_space<vmem>>, vector<128x3xbf16>
    %cst_29 = arith.constant dense<0.000000e+00> : vector<128x3xf32>
    %37 = tpu.matmul %35, %36, %cst_29 {dimension_numbers = #tpu.dot_dimension_numbers<[1], [0], [0], [1], [0, 0, 1, 1], [], []>} : vector<128x128xbf16>, vector<128x3xbf16>, vector<128x3xf32> -> vector<128x3xf32>
    %c0_30 = arith.constant 0 : index
    %c0_31 = arith.constant 0 : index
    %38 = vector.load %arg13[%c0_30, %c0_31] : memref<1x3xf32, #tpu.memory_space<vmem>>, vector<1x3xf32>
    %39 = vector.broadcast %38 : vector<1x3xf32> to vector<128x3xf32>
    %40 = arith.addf %37, %39 : vector<128x3xf32>
    %41 = arith.truncf %40 : vector<128x3xf32> to vector<128x3xbf16>
    %c0_32 = arith.constant 0 : index
    %c0_33 = arith.constant 0 : index
    %42 = vector.load %arg15[%c0_32, %c0_33] : memref<32x256xbf16, #tpu.memory_space<vmem>>, vector<32x256xbf16>
    %cst_34 = arith.constant dense<0.000000e+00> : vector<8x256xf32>
    %43 = tpu.matmul %10, %42, %cst_34 {dimension_numbers = #tpu.dot_dimension_numbers<[1], [0], [0], [1], [0, 0, 1, 1], [], []>} : vector<8x32xbf16>, vector<32x256xbf16>, vector<8x256xf32> -> vector<8x256xf32>
    %c0_35 = arith.constant 0 : index
    %c0_36 = arith.constant 0 : index
    %44 = vector.load %arg16[%c0_35, %c0_36] : memref<1x256xf32, #tpu.memory_space<vmem>>, vector<1x256xf32>
    %45 = vector.broadcast %44 : vector<1x256xf32> to vector<8x256xf32>
    %46 = arith.addf %43, %45 : vector<8x256xf32>
    %c0_37 = arith.constant 0 : index
    %c0_38 = arith.constant 0 : index
    %47 = vector.load %arg14[%c0_37, %c0_38] : memref<3x256xbf16, #tpu.memory_space<vmem>>, vector<3x256xbf16>
    %cst_39 = arith.constant dense<0.000000e+00> : vector<128x256xf32>
    %48 = tpu.matmul %41, %47, %cst_39 {dimension_numbers = #tpu.dot_dimension_numbers<[1], [0], [0], [1], [0, 0, 1, 1], [], []>} : vector<128x3xbf16>, vector<3x256xbf16>, vector<128x256xf32> -> vector<128x256xf32>
    %49 = vector.shape_cast %48 : vector<128x256xf32> to vector<8x16x256xf32>
    %50 = vector.shape_cast %46 : vector<8x256xf32> to vector<8x1x256xf32>
    %51 = vector.broadcast %50 : vector<8x1x256xf32> to vector<8x16x256xf32>
    %52 = arith.addf %49, %51 : vector<8x16x256xf32>
    %cst_40 = arith.constant 0.000000e+00 : f32
    %53 = vector.broadcast %cst_40 : f32 to vector<8x16x256xf32>
    %54 = arith.maximumf %52, %53 : vector<8x16x256xf32>
    %55 = vector.shape_cast %54 : vector<8x16x256xf32> to vector<128x256xf32>
    %56 = arith.truncf %55 : vector<128x256xf32> to vector<128x256xbf16>
    %c0_41 = arith.constant 0 : index
    %c0_42 = arith.constant 0 : index
    %57 = vector.load %arg17[%c0_41, %c0_42] : memref<256x128xbf16, #tpu.memory_space<vmem>>, vector<256x128xbf16>
    %cst_43 = arith.constant dense<0.000000e+00> : vector<128x128xf32>
    %58 = tpu.matmul %56, %57, %cst_43 {dimension_numbers = #tpu.dot_dimension_numbers<[1], [0], [0], [1], [0, 0, 1, 1], [], []>} : vector<128x256xbf16>, vector<256x128xbf16>, vector<128x128xf32> -> vector<128x128xf32>
    %c0_44 = arith.constant 0 : index
    %c0_45 = arith.constant 0 : index
    %59 = vector.load %arg18[%c0_44, %c0_45] : memref<1x128xf32, #tpu.memory_space<vmem>>, vector<1x128xf32>
    %60 = vector.broadcast %59 : vector<1x128xf32> to vector<128x128xf32>
    %61 = arith.addf %58, %60 : vector<128x128xf32>
    %cst_46 = arith.constant 0.000000e+00 : f32
    %62 = vector.broadcast %cst_46 : f32 to vector<128x128xf32>
    %63 = arith.maximumf %61, %62 : vector<128x128xf32>
    %64 = arith.truncf %63 : vector<128x128xf32> to vector<128x128xbf16>
    %c0_47 = arith.constant 0 : index
    %c0_48 = arith.constant 0 : index
    %65 = vector.load %arg19[%c0_47, %c0_48] : memref<128x3xbf16, #tpu.memory_space<vmem>>, vector<128x3xbf16>
    %cst_49 = arith.constant dense<0.000000e+00> : vector<128x3xf32>
    %66 = tpu.matmul %64, %65, %cst_49 {dimension_numbers = #tpu.dot_dimension_numbers<[1], [0], [0], [1], [0, 0, 1, 1], [], []>} : vector<128x128xbf16>, vector<128x3xbf16>, vector<128x3xf32> -> vector<128x3xf32>
    %c0_50 = arith.constant 0 : index
    %c0_51 = arith.constant 0 : index
    %67 = vector.load %arg20[%c0_50, %c0_51] : memref<1x3xf32, #tpu.memory_space<vmem>>, vector<1x3xf32>
    %68 = vector.broadcast %67 : vector<1x3xf32> to vector<128x3xf32>
    %69 = arith.addf %66, %68 : vector<128x3xf32>
    %c0_52 = arith.constant 0 : index
    %c0_53 = arith.constant 0 : index
    %70 = vector.load %arg21[%c0_52, %c0_53] : memref<128x3xf32, #tpu.memory_space<vmem>>, vector<128x3xf32>
    tpu.vector_store %arg21[%c0_52, %c0_53], %69 {strides = array<i32>} : memref<128x3xf32, #tpu.memory_space<vmem>>, vector<128x3xf32>,
    return
  }
  func.func @transform_0(%arg0: i32) -> (i32, i32) {
    %c0_i32 = arith.constant 0 : i32
    %c0_i32_0 = arith.constant 0 : i32
    return %arg0, %c0_i32 : i32, i32
  }
  func.func @transform_1(%arg0: i32) -> (i32, i32) {
    %c0_i32 = arith.constant 0 : i32
    %c0_i32_0 = arith.constant 0 : i32
    return %arg0, %c0_i32 : i32, i32
  }
  func.func @transform_2(%arg0: i32) -> (i32, i32) {
    %c0_i32 = arith.constant 0 : i32
    %c0_i32_0 = arith.constant 0 : i32
    %c0_i32_1 = arith.constant 0 : i32
    return %c0_i32, %c0_i32_0 : i32, i32
  }
  func.func @transform_3(%arg0: i32) -> (i32, i32) {
    %c0_i32 = arith.constant 0 : i32
    %c0_i32_0 = arith.constant 0 : i32
    %c0_i32_1 = arith.constant 0 : i32
    return %c0_i32, %c0_i32_0 : i32, i32
  }
  func.func @transform_4(%arg0: i32) -> (i32, i32) {
    %c0_i32 = arith.constant 0 : i32
    %c0_i32_0 = arith.constant 0 : i32
    %c0_i32_1 = arith.constant 0 : i32
    return %c0_i32, %c0_i32_0 : i32, i32
  }
  func.func @transform_5(%arg0: i32) -> (i32, i32) {
    %c0_i32 = arith.constant 0 : i32
    %c0_i32_0 = arith.constant 0 : i32
    %c0_i32_1 = arith.constant 0 : i32
    return %c0_i32, %c0_i32_0 : i32, i32
  }
  func.func @transform_6(%arg0: i32) -> (i32, i32) {
    %c0_i32 = arith.constant 0 : i32
    %c0_i32_0 = arith.constant 0 : i32
    %c0_i32_1 = arith.constant 0 : i32
    return %c0_i32, %c0_i32_0 : i32, i32
  }
  func.func @transform_7(%arg0: i32) -> (i32, i32) {
    %c0_i32 = arith.constant 0 : i32
    %c0_i32_0 = arith.constant 0 : i32
    %c0_i32_1 = arith.constant 0 : i32
    return %c0_i32, %c0_i32_0 : i32, i32
  }
  func.func @transform_8(%arg0: i32) -> (i32, i32) {
    %c0_i32 = arith.constant 0 : i32
    %c0_i32_0 = arith.constant 0 : i32
    %c0_i32_1 = arith.constant 0 : i32
    return %c0_i32, %c0_i32_0 : i32, i32
  }
  func.func @transform_9(%arg0: i32) -> (i32, i32) {
    %c0_i32 = arith.constant 0 : i32
    %c0_i32_0 = arith.constant 0 : i32
    %c0_i32_1 = arith.constant 0 : i32
    return %c0_i32, %c0_i32_0 : i32, i32
  }
  func.func @transform_10(%arg0: i32) -> (i32, i32) {
    %c0_i32 = arith.constant 0 : i32
    %c0_i32_0 = arith.constant 0 : i32
    %c0_i32_1 = arith.constant 0 : i32
    return %c0_i32, %c0_i32_0 : i32, i32
  }
  func.func @transform_11(%arg0: i32) -> (i32, i32) {
    %c0_i32 = arith.constant 0 : i32
    %c0_i32_0 = arith.constant 0 : i32
    %c0_i32_1 = arith.constant 0 : i32
    return %c0_i32, %c0_i32_0 : i32, i32
  }
  func.func @transform_12(%arg0: i32) -> (i32, i32) {
    %c0_i32 = arith.constant 0 : i32
    %c0_i32_0 = arith.constant 0 : i32
    %c0_i32_1 = arith.constant 0 : i32
    return %c0_i32, %c0_i32_0 : i32, i32
  }
  func.func @transform_13(%arg0: i32) -> (i32, i32) {
    %c0_i32 = arith.constant 0 : i32
    %c0_i32_0 = arith.constant 0 : i32
    %c0_i32_1 = arith.constant 0 : i32
    return %c0_i32, %c0_i32_0 : i32, i32
  }
  func.func @transform_14(%arg0: i32) -> (i32, i32) {
    %c0_i32 = arith.constant 0 : i32
    %c0_i32_0 = arith.constant 0 : i32
    %c0_i32_1 = arith.constant 0 : i32
    return %c0_i32, %c0_i32_0 : i32, i32
  }
  func.func @transform_15(%arg0: i32) -> (i32, i32) {
    %c0_i32 = arith.constant 0 : i32
    %c0_i32_0 = arith.constant 0 : i32
    %c0_i32_1 = arith.constant 0 : i32
    return %c0_i32, %c0_i32_0 : i32, i32
  }
  func.func @transform_16(%arg0: i32) -> (i32, i32) {
    %c0_i32 = arith.constant 0 : i32
    %c0_i32_0 = arith.constant 0 : i32
    %c0_i32_1 = arith.constant 0 : i32
    return %c0_i32, %c0_i32_0 : i32, i32
  }
  func.func @transform_17(%arg0: i32) -> (i32, i32) {
    %c0_i32 = arith.constant 0 : i32
    %c0_i32_0 = arith.constant 0 : i32
    %c0_i32_1 = arith.constant 0 : i32
    return %c0_i32, %c0_i32_0 : i32, i32
  }
  func.func @transform_18(%arg0: i32) -> (i32, i32) {
    %c0_i32 = arith.constant 0 : i32
    %c0_i32_0 = arith.constant 0 : i32
    %c0_i32_1 = arith.constant 0 : i32
    return %c0_i32, %c0_i32_0 : i32, i32
  }
  func.func @transform_19(%arg0: i32) -> (i32, i32) {
    %c0_i32 = arith.constant 0 : i32
    %c0_i32_0 = arith.constant 0 : i32
    %c0_i32_1 = arith.constant 0 : i32
    return %c0_i32, %c0_i32_0 : i32, i32
  }
  func.func @transform_20(%arg0: i32) -> (i32, i32) {
    %c0_i32 = arith.constant 0 : i32
    %c0_i32_0 = arith.constant 0 : i32
    return %arg0, %c0_i32 : i32, i32
  }
}

</mosaic_0001>

<llo_original>
// kernel: tpu_custom_call.1
$region0: #{tpu_custom_call.1}
  #allocation0 [shape = 'u32[]', space=smem, size = 0x4, offset = 0x4, fixed_abs, tag = 'smem constant byte address 0x4 - core index']
  #allocation1 [shape = 'u32[144,128]{1,0:T(1,128)}', space=vmem, size = 0x12000, scoped, tag = 'internal scratch']
  %s0 = inlined_call_operand.hbm [shape: bf16[16,32], index: 0, kind: input, shape index: {}]
  %s1 = inlined_call_operand.vmem [shape: bf16[16,3], index: 1, kind: input, shape index: {}]
  %s2 = inlined_call_operand.vmem [shape: bf16[16,2], index: 2, kind: input, shape index: {}]
  %s3 = inlined_call_operand.hbm [shape: bf16[32,32], index: 3, kind: input, shape index: {}]
  %s4 = inlined_call_operand.hbm [shape: bf16[3,32], index: 4, kind: input, shape index: {}]
  %s5 = inlined_call_operand.hbm [shape: f32[1,32], index: 5, kind: input, shape index: {}]
  %s6 = inlined_call_operand.hbm [shape: bf16[2,256], index: 6, kind: input, shape index: {}]
  %s7 = inlined_call_operand.vmem [shape: bf16[32,256], index: 7, kind: input, shape index: {}]
  %s8 = inlined_call_operand.hbm [shape: f32[1,256], index: 8, kind: input, shape index: {}]
  %s9 = inlined_call_operand.vmem [shape: bf16[256,128], index: 9, kind: input, shape index: {}]
  %s10 = inlined_call_operand.hbm [shape: f32[1,128], index: 10, kind: input, shape index: {}]
  %s11 = inlined_call_operand.vmem [shape: bf16[128,3], index: 11, kind: input, shape index: {}]
  %s12 = inlined_call_operand.hbm [shape: f32[1,3], index: 12, kind: input, shape index: {}]
  %s13 = inlined_call_operand.vmem [shape: bf16[3,256], index: 13, kind: input, shape index: {}]
  %s14 = inlined_call_operand.vmem [shape: bf16[32,256], index: 14, kind: input, shape index: {}]
  %s15 = inlined_call_operand.vmem [shape: f32[1,256], index: 15, kind: input, shape index: {}]
  %s16 = inlined_call_operand.hbm [shape: bf16[256,128], index: 16, kind: input, shape index: {}]
  %s17 = inlined_call_operand.vmem [shape: f32[1,128], index: 17, kind: input, shape index: {}]
  %s18 = inlined_call_operand.vmem [shape: bf16[128,3], index: 18, kind: input, shape index: {}]
  %s19 = inlined_call_operand.vmem [shape: f32[1,3], index: 19, kind: input, shape index: {}]
  %s20 = inlined_call_operand.vmem [shape: f32[256,3], index: 20, kind: output, shape index: {}]
  %s21 = sld [smem:[#allocation0]]
  $region149: #{tpu_custom_call.1} parent=0
    _
  %s23 = ssub.s32 1, %s21
  %s24 = scalar_select 0, %s23, %s21
  $region1: #{tpu_custom_call.1} parent=0
    #allocation2 [shape = 'u8[4096]{0}', space=vmem, size = 0x1000, scoped, tag = 'input window, operand 0']
    #allocation3 [shape = 's32[2]{0}', space=sflag, size = 0x8, scoped, tag = 'scoped memory for tpu_custom_call.1']
    #allocation4 [shape = 'u8[8192]{0}', space=vmem, size = 0x2000, scoped, tag = 'input window, operand 3, single buffered']
    #allocation5 [shape = 's32[1]{0}', space=sflag, size = 0x4, scoped, tag = 'scoped memory for tpu_custom_call.1']
    #allocation6 [shape = 'u8[1024]{0}', space=vmem, size = 0x400, scoped, tag = 'input window, operand 4, single buffered']
    #allocation7 [shape = 'u8[512]{0}', space=vmem, size = 0x400, scoped, tag = 'input window, operand 5, single buffered']
    #allocation8 [shape = 's32[1]{0}', space=sflag, size = 0x4, scoped, tag = 'scoped memory for tpu_custom_call.1']
    #allocation9 [shape = 'u8[1024]{0}', space=vmem, size = 0x400, scoped, tag = 'input window, operand 6, single buffered']
    #allocation10 [shape = 'u8[1024]{0}', space=vmem, size = 0x400, scoped, tag = 'input window, operand 8, single buffered']
    #allocation11 [shape = 's32[1]{0}', space=sflag, size = 0x4, scoped, tag = 'scoped memory for tpu_custom_call.1']
    #allocation12 [shape = 'u8[512]{0}', space=vmem, size = 0x400, scoped, tag = 'input window, operand 10, single buffered']
    #allocation13 [shape = 'u8[512]{0}', space=vmem, size = 0x400, scoped, tag = 'input window, operand 12, single buffered']
    #allocation14 [shape = 's32[1]{0}', space=sflag, size = 0x4, scoped, tag = 'scoped memory for tpu_custom_call.1']
    #allocation15 [shape = 'u8[65536]{0}', space=vmem, size = 0x10000, scoped, tag = 'input window, operand 16, single buffered']
    %25 = vsyncpa [#allocation3], 0
    %s26 = scalar_lea.sflag [#allocation3], 1
    %27 = vsyncpa %s26, 0
    %28 = vsyncpa [#allocation5], 0
    %29 = vsyncpa [#allocation8], 0
    %30 = vsyncpa [#allocation11], 0
    %31 = vsyncpa [#allocation14], 0
    loop: start=0, step=1, limit=4
    $region2: #{tpu_custom_call.1} parent=1 // loop_pre_header
      _
    $region3: #{tpu_custom_call.1} parent=1 // loop_header
      %s33 = sphi 0, %s37
      %p34 = scmp.ge.s32.totalorder %s33, 4
      %s43 = sphi 0, %s45
      %s46 = sphi 0, %s43
      %s47 = sphi 0, %s46
      %s63 = sphi 0, %s47
      %s69 = sphi 0, %s71
      %s72 = sphi 0, %s69
      %s73 = sphi 0, %s72
      %s89 = sphi 0, %s73
      %s93 = sphi 0, %s93
      %s95 = sphi 0, %s93
      %s96 = sphi 0, %s95
      %s110 = sphi 0, %s96
      %s114 = sphi 0, %s114
      %s116 = sphi 0, %s114
      %s117 = sphi 0, %s116
      %s131 = sphi 0, %s117
      %s135 = sphi 0, %s135
      %s137 = sphi 0, %s135
      %s138 = sphi 0, %s137
      %s152 = sphi 0, %s138
      %s156 = sphi 0, %s156
      %s158 = sphi 0, %s156
      %s159 = sphi 0, %s158
      %s173 = sphi 0, %s159
      %s177 = sphi 0, %s177
      %s179 = sphi 0, %s177
      %s180 = sphi 0, %s179
      %s194 = sphi 0, %s180
      %s198 = sphi 0, %s198
      %s200 = sphi 0, %s198
      %s201 = sphi 0, %s200
      %s215 = sphi 0, %s201
      %s219 = sphi 0, %s219
      %s221 = sphi 0, %s219
      %s222 = sphi 0, %s221
      %s236 = sphi 0, %s222
      %s240 = sphi 0, %s240
      %s242 = sphi 0, %s240
      %s243 = sphi 0, %s242
      %s257 = sphi 0, %s243
      %s261 = sphi 0, %s261
      %s263 = sphi 0, %s261
      %s264 = sphi 0, %s263
      %s278 = sphi 0, %s264
      %s282 = sphi 0, %s282
      %s284 = sphi 0, %s282
      %s285 = sphi 0, %s284
      %s299 = sphi 0, %s285
      %s303 = sphi 0, %s303
      %s305 = sphi 0, %s303
      %s306 = sphi 0, %s305
      %s320 = sphi 0, %s306
      %s324 = sphi 0, %s324
      %s326 = sphi 0, %s324
      %s327 = sphi 0, %s326
      %s341 = sphi 0, %s327
      %s345 = sphi 0, %s345
      %s347 = sphi 0, %s345
      %s348 = sphi 0, %s347
      %s362 = sphi 0, %s348
      %s366 = sphi 0, %s366
      %s368 = sphi 0, %s366
      %s369 = sphi 0, %s368
      %s383 = sphi 0, %s369
      %s387 = sphi 0, %s387
      %s389 = sphi 0, %s387
      %s390 = sphi 0, %s389
      %s404 = sphi 0, %s390
      %s408 = sphi 0, %s408
      %s410 = sphi 0, %s408
      %s411 = sphi 0, %s410
      %s425 = sphi 0, %s411
      %s429 = sphi 0, %s429
      %s431 = sphi 0, %s429
      %s432 = sphi 0, %s431
      %s446 = sphi 0, %s432
      %s450 = sphi 0, %s450
      %s452 = sphi 0, %s450
      %s453 = sphi 0, %s452
      %s467 = sphi 0, %s453
      %s473 = sphi 0, %s475
      %s476 = sphi 0, %s473
      %s477 = sphi 0, %s476
      %s493 = sphi 0, %s477
    $region4: #{tpu_custom_call.1} parent=1 // loop_header_branch
      %36 = sbr.rel (%p34) target = $region8
    $region5: #{tpu_custom_call.1} parent=1 // loop_body
      %s38 = ssub.s32 %s33, 1
      %s39 = ssub.s32 %s33, 2
      %s40 = sadd.s32 %s33, 1
      %s41 = ssub.s32 %s33, %s40
      %p42 = scmp.eq.s32.totalorder %s41, 0
      %s44 = sadd.s32 %s43, 1
      %s45 = scalar_select %p42, %s43, %s44
      %p48 = pneg %p42
      %p49 = scmp.eq.s32.totalorder %s33, 1
      %p50 = por %p48, %p49
      %p51 = scmp.ne.s32.totalorder %s43, %s46
      %p52 = scmp.eq.s32.totalorder %s33, 0
      %p53 = por %p51, %p52
      %p54 = scmp.ne.s32.totalorder %s43, %s46
      %p55 = scmp.eq.s32.totalorder %s38, 1
      %p56 = por %p54, %p55
      %p57 = scmp.ne.s32.totalorder %s46, %s47
      %p58 = scmp.eq.s32.totalorder %s38, 0
      %p59 = por %p57, %p58
      %p60 = scmp.ne.s32.totalorder %s46, %s47
      %p61 = scmp.eq.s32.totalorder %s39, 1
      %p62 = por %p60, %p61
      %p64 = scmp.ne.s32.totalorder %s47, %s63
      %p65 = scmp.eq.s32.totalorder %s39, 0
      %p66 = por %p64, %p65
      %s67 = ssub.s32 %s33, %s40
      %p68 = scmp.eq.s32.totalorder %s67, 0
      %s70 = sadd.s32 %s69, 1
      %s71 = scalar_select %p68, %s69, %s70
      %p74 = pneg %p68
      %p75 = scmp.eq.s32.totalorder %s33, 1
      %p76 = por %p74, %p75
      %p77 = scmp.ne.s32.totalorder %s69, %s72
      %p78 = scmp.eq.s32.totalorder %s33, 0
      %p79 = por %p77, %p78
      %p80 = scmp.ne.s32.totalorder %s69, %s72
      %p81 = scmp.eq.s32.totalorder %s38, 1
      %p82 = por %p80, %p81
      %p83 = scmp.ne.s32.totalorder %s72, %s73
      %p84 = scmp.eq.s32.totalorder %s38, 0
      %p85 = por %p83, %p84
      %p86 = scmp.ne.s32.totalorder %s72, %s73
      %p87 = scmp.eq.s32.totalorder %s39, 1
      %p88 = por %p86, %p87
      %p90 = scmp.ne.s32.totalorder %s73, %s89
      %p91 = scmp.eq.s32.totalorder %s39, 0
      %p92 = por %p90, %p91
      %s94 = sadd.s32 %s93, 1
      %p97 = scmp.eq.s32.totalorder %s33, 1
      %p98 = scmp.ne.s32.totalorder %s93, %s95
      %p99 = scmp.eq.s32.totalorder %s33, 0
      %p100 = por %p98, %p99
      %p101 = scmp.ne.s32.totalorder %s93, %s95
      %p102 = scmp.eq.s32.totalorder %s38, 1
      %p103 = por %p101, %p102
      %p104 = scmp.ne.s32.totalorder %s95, %s96
      %p105 = scmp.eq.s32.totalorder %s38, 0
      %p106 = por %p104, %p105
      %p107 = scmp.ne.s32.totalorder %s95, %s96
      %p108 = scmp.eq.s32.totalorder %s39, 1
      %p109 = por %p107, %p108
      %p111 = scmp.ne.s32.totalorder %s96, %s110
      %p112 = scmp.eq.s32.totalorder %s39, 0
      %p113 = por %p111, %p112
      %s115 = sadd.s32 %s114, 1
      %p118 = scmp.eq.s32.totalorder %s33, 1
      %p119 = scmp.ne.s32.totalorder %s114, %s116
      %p120 = scmp.eq.s32.totalorder %s33, 0
      %p121 = por %p119, %p120
      %p122 = scmp.ne.s32.totalorder %s114, %s116
      %p123 = scmp.eq.s32.totalorder %s38, 1
      %p124 = por %p122, %p123
      %p125 = scmp.ne.s32.totalorder %s116, %s117
      %p126 = scmp.eq.s32.totalorder %s38, 0
      %p127 = por %p125, %p126
      %p128 = scmp.ne.s32.totalorder %s116, %s117
      %p129 = scmp.eq.s32.totalorder %s39, 1
      %p130 = por %p128, %p129
      %p132 = scmp.ne.s32.totalorder %s117, %s131
      %p133 = scmp.eq.s32.totalorder %s39, 0
      %p134 = por %p132, %p133
      %s136 = sadd.s32 %s135, 1
      %p139 = scmp.eq.s32.totalorder %s33, 1
      %p140 = scmp.ne.s32.totalorder %s135, %s137
      %p141 = scmp.eq.s32.totalorder %s33, 0
      %p142 = por %p140, %p141
      %p143 = scmp.ne.s32.totalorder %s135, %s137
      %p144 = scmp.eq.s32.totalorder %s38, 1
      %p145 = por %p143, %p144
      %p146 = scmp.ne.s32.totalorder %s137, %s138
      %p147 = scmp.eq.s32.totalorder %s38, 0
      %p148 = por %p146, %p147
      %p149 = scmp.ne.s32.totalorder %s137, %s138
      %p150 = scmp.eq.s32.totalorder %s39, 1
      %p151 = por %p149, %p150
      %p153 = scmp.ne.s32.totalorder %s138, %s152
      %p154 = scmp.eq.s32.totalorder %s39, 0
      %p155 = por %p153, %p154
      %s157 = sadd.s32 %s156, 1
      %p160 = scmp.eq.s32.totalorder %s33, 1
      %p161 = scmp.ne.s32.totalorder %s156, %s158
      %p162 = scmp.eq.s32.totalorder %s33, 0
      %p163 = por %p161, %p162
      %p164 = scmp.ne.s32.totalorder %s156, %s158
      %p165 = scmp.eq.s32.totalorder %s38, 1
      %p166 = por %p164, %p165
      %p167 = scmp.ne.s32.totalorder %s158, %s159
      %p168 = scmp.eq.s32.totalorder %s38, 0
      %p169 = por %p167, %p168
      %p170 = scmp.ne.s32.totalorder %s158, %s159
      %p171 = scmp.eq.s32.totalorder %s39, 1
      %p172 = por %p170, %p171
      %p174 = scmp.ne.s32.totalorder %s159, %s173
      %p175 = scmp.eq.s32.totalorder %s39, 0
      %p176 = por %p174, %p175
      %s178 = sadd.s32 %s177, 1
      %p181 = scmp.eq.s32.totalorder %s33, 1
      %p182 = scmp.ne.s32.totalorder %s177, %s179
      %p183 = scmp.eq.s32.totalorder %s33, 0
      %p184 = por %p182, %p183
      %p185 = scmp.ne.s32.totalorder %s177, %s179
      %p186 = scmp.eq.s32.totalorder %s38, 1
      %p187 = por %p185, %p186
      %p188 = scmp.ne.s32.totalorder %s179, %s180
      %p189 = scmp.eq.s32.totalorder %s38, 0
      %p190 = por %p188, %p189
      %p191 = scmp.ne.s32.totalorder %s179, %s180
      %p192 = scmp.eq.s32.totalorder %s39, 1
      %p193 = por %p191, %p192
      %p195 = scmp.ne.s32.totalorder %s180, %s194
      %p196 = scmp.eq.s32.totalorder %s39, 0
      %p197 = por %p195, %p196
      %s199 = sadd.s32 %s198, 1
      %p202 = scmp.eq.s32.totalorder %s33, 1
      %p203 = scmp.ne.s32.totalorder %s198, %s200
      %p204 = scmp.eq.s32.totalorder %s33, 0
      %p205 = por %p203, %p204
      %p206 = scmp.ne.s32.totalorder %s198, %s200
      %p207 = scmp.eq.s32.totalorder %s38, 1
      %p208 = por %p206, %p207
      %p209 = scmp.ne.s32.totalorder %s200, %s201
      %p210 = scmp.eq.s32.totalorder %s38, 0
      %p211 = por %p209, %p210
      %p212 = scmp.ne.s32.totalorder %s200, %s201
      %p213 = scmp.eq.s32.totalorder %s39, 1
      %p214 = por %p212, %p213
      %p216 = scmp.ne.s32.totalorder %s201, %s215
      %p217 = scmp.eq.s32.totalorder %s39, 0
      %p218 = por %p216, %p217
      %s220 = sadd.s32 %s219, 1
      %p223 = scmp.eq.s32.totalorder %s33, 1
      %p224 = scmp.ne.s32.totalorder %s219, %s221
      %p225 = scmp.eq.s32.totalorder %s33, 0
      %p226 = por %p224, %p225
      %p227 = scmp.ne.s32.totalorder %s219, %s221
      %p228 = scmp.eq.s32.totalorder %s38, 1
      %p229 = por %p227, %p228
      %p230 = scmp.ne.s32.totalorder %s221, %s222
      %p231 = scmp.eq.s32.totalorder %s38, 0
      %p232 = por %p230, %p231
      %p233 = scmp.ne.s32.totalorder %s221, %s222
      %p234 = scmp.eq.s32.totalorder %s39, 1
      %p235 = por %p233, %p234
      %p237 = scmp.ne.s32.totalorder %s222, %s236
      %p238 = scmp.eq.s32.totalorder %s39, 0
      %p239 = por %p237, %p238
      %s241 = sadd.s32 %s240, 1
      %p244 = scmp.eq.s32.totalorder %s33, 1
      %p245 = scmp.ne.s32.totalorder %s240, %s242
      %p246 = scmp.eq.s32.totalorder %s33, 0
      %p247 = por %p245, %p246
      %p248 = scmp.ne.s32.totalorder %s240, %s242
      %p249 = scmp.eq.s32.totalorder %s38, 1
      %p250 = por %p248, %p249
      %p251 = scmp.ne.s32.totalorder %s242, %s243
      %p252 = scmp.eq.s32.totalorder %s38, 0
      %p253 = por %p251, %p252
      %p254 = scmp.ne.s32.totalorder %s242, %s243
      %p255 = scmp.eq.s32.totalorder %s39, 1
      %p256 = por %p254, %p255
      %p258 = scmp.ne.s32.totalorder %s243, %s257
      %p259 = scmp.eq.s32.totalorder %s39, 0
      %p260 = por %p258, %p259
      %s262 = sadd.s32 %s261, 1
      %p265 = scmp.eq.s32.totalorder %s33, 1
      %p266 = scmp.ne.s32.totalorder %s261, %s263
      %p267 = scmp.eq.s32.totalorder %s33, 0
      %p268 = por %p266, %p267
      %p269 = scmp.ne.s32.totalorder %s261, %s263
      %p270 = scmp.eq.s32.totalorder %s38, 1
      %p271 = por %p269, %p270
      %p272 = scmp.ne.s32.totalorder %s263, %s264
      %p273 = scmp.eq.s32.totalorder %s38, 0
      %p274 = por %p272, %p273
      %p275 = scmp.ne.s32.totalorder %s263, %s264
      %p276 = scmp.eq.s32.totalorder %s39, 1
      %p277 = por %p275, %p276
      %p279 = scmp.ne.s32.totalorder %s264, %s278
      %p280 = scmp.eq.s32.totalorder %s39, 0
      %p281 = por %p279, %p280
      %s283 = sadd.s32 %s282, 1
      %p286 = scmp.eq.s32.totalorder %s33, 1
      %p287 = scmp.ne.s32.totalorder %s282, %s284
      %p288 = scmp.eq.s32.totalorder %s33, 0
      %p289 = por %p287, %p288
      %p290 = scmp.ne.s32.totalorder %s282, %s284
      %p291 = scmp.eq.s32.totalorder %s38, 1
      %p292 = por %p290, %p291
      %p293 = scmp.ne.s32.totalorder %s284, %s285
      %p294 = scmp.eq.s32.totalorder %s38, 0
      %p295 = por %p293, %p294
      %p296 = scmp.ne.s32.totalorder %s284, %s285
      %p297 = scmp.eq.s32.totalorder %s39, 1
      %p298 = por %p296, %p297
      %p300 = scmp.ne.s32.totalorder %s285, %s299
      %p301 = scmp.eq.s32.totalorder %s39, 0
      %p302 = por %p300, %p301
      %s304 = sadd.s32 %s303, 1
      %p307 = scmp.eq.s32.totalorder %s33, 1
      %p308 = scmp.ne.s32.totalorder %s303, %s305
      %p309 = scmp.eq.s32.totalorder %s33, 0
      %p310 = por %p308, %p309
      %p311 = scmp.ne.s32.totalorder %s303, %s305
      %p312 = scmp.eq.s32.totalorder %s38, 1
      %p313 = por %p311, %p312
      %p314 = scmp.ne.s32.totalorder %s305, %s306
      %p315 = scmp.eq.s32.totalorder %s38, 0
      %p316 = por %p314, %p315
      %p317 = scmp.ne.s32.totalorder %s305, %s306
      %p318 = scmp.eq.s32.totalorder %s39, 1
      %p319 = por %p317, %p318
      %p321 = scmp.ne.s32.totalorder %s306, %s320
      %p322 = scmp.eq.s32.totalorder %s39, 0
      %p323 = por %p321, %p322
      %s325 = sadd.s32 %s324, 1
      %p328 = scmp.eq.s32.totalorder %s33, 1
      %p329 = scmp.ne.s32.totalorder %s324, %s326
      %p330 = scmp.eq.s32.totalorder %s33, 0
      %p331 = por %p329, %p330
      %p332 = scmp.ne.s32.totalorder %s324, %s326
      %p333 = scmp.eq.s32.totalorder %s38, 1
      %p334 = por %p332, %p333
      %p335 = scmp.ne.s32.totalorder %s326, %s327
      %p336 = scmp.eq.s32.totalorder %s38, 0
      %p337 = por %p335, %p336
      %p338 = scmp.ne.s32.totalorder %s326, %s327
      %p339 = scmp.eq.s32.totalorder %s39, 1
      %p340 = por %p338, %p339
      %p342 = scmp.ne.s32.totalorder %s327, %s341
      %p343 = scmp.eq.s32.totalorder %s39, 0
      %p344 = por %p342, %p343
      %s346 = sadd.s32 %s345, 1
      %p349 = scmp.eq.s32.totalorder %s33, 1
      %p350 = scmp.ne.s32.totalorder %s345, %s347
      %p351 = scmp.eq.s32.totalorder %s33, 0
      %p352 = por %p350, %p351
      %p353 = scmp.ne.s32.totalorder %s345, %s347
      %p354 = scmp.eq.s32.totalorder %s38, 1
      %p355 = por %p353, %p354
      %p356 = scmp.ne.s32.totalorder %s347, %s348
      %p357 = scmp.eq.s32.totalorder %s38, 0
      %p358 = por %p356, %p357
      %p359 = scmp.ne.s32.totalorder %s347, %s348
      %p360 = scmp.eq.s32.totalorder %s39, 1
      %p361 = por %p359, %p360
      %p363 = scmp.ne.s32.totalorder %s348, %s362
      %p364 = scmp.eq.s32.totalorder %s39, 0
      %p365 = por %p363, %p364
      %s367 = sadd.s32 %s366, 1
      %p370 = scmp.eq.s32.totalorder %s33, 1
      %p371 = scmp.ne.s32.totalorder %s366, %s368
      %p372 = scmp.eq.s32.totalorder %s33, 0
      %p373 = por %p371, %p372
      %p374 = scmp.ne.s32.totalorder %s366, %s368
      %p375 = scmp.eq.s32.totalorder %s38, 1
      %p376 = por %p374, %p375
      %p377 = scmp.ne.s32.totalorder %s368, %s369
      %p378 = scmp.eq.s32.totalorder %s38, 0
      %p379 = por %p377, %p378
      %p380 = scmp.ne.s32.totalorder %s368, %s369
      %p381 = scmp.eq.s32.totalorder %s39, 1
      %p382 = por %p380, %p381
      %p384 = scmp.ne.s32.totalorder %s369, %s383
      %p385 = scmp.eq.s32.totalorder %s39, 0
      %p386 = por %p384, %p385
      %s388 = sadd.s32 %s387, 1
      %p391 = scmp.eq.s32.totalorder %s33, 1
      %p392 = scmp.ne.s32.totalorder %s387, %s389
      %p393 = scmp.eq.s32.totalorder %s33, 0
      %p394 = por %p392, %p393
      %p395 = scmp.ne.s32.totalorder %s387, %s389
      %p396 = scmp.eq.s32.totalorder %s38, 1
      %p397 = por %p395, %p396
      %p398 = scmp.ne.s32.totalorder %s389, %s390
      %p399 = scmp.eq.s32.totalorder %s38, 0
      %p400 = por %p398, %p399
      %p401 = scmp.ne.s32.totalorder %s389, %s390
      %p402 = scmp.eq.s32.totalorder %s39, 1
      %p403 = por %p401, %p402
      %p405 = scmp.ne.s32.totalorder %s390, %s404
      %p406 = scmp.eq.s32.totalorder %s39, 0
      %p407 = por %p405, %p406
      %s409 = sadd.s32 %s408, 1
      %p412 = scmp.eq.s32.totalorder %s33, 1
      %p413 = scmp.ne.s32.totalorder %s408, %s410
      %p414 = scmp.eq.s32.totalorder %s33, 0
      %p415 = por %p413, %p414
      %p416 = scmp.ne.s32.totalorder %s408, %s410
      %p417 = scmp.eq.s32.totalorder %s38, 1
      %p418 = por %p416, %p417
      %p419 = scmp.ne.s32.totalorder %s410, %s411
      %p420 = scmp.eq.s32.totalorder %s38, 0
      %p421 = por %p419, %p420
      %p422 = scmp.ne.s32.totalorder %s410, %s411
      %p423 = scmp.eq.s32.totalorder %s39, 1
      %p424 = por %p422, %p423
      %p426 = scmp.ne.s32.totalorder %s411, %s425
      %p427 = scmp.eq.s32.totalorder %s39, 0
      %p428 = por %p426, %p427
      %s430 = sadd.s32 %s429, 1
      %p433 = scmp.eq.s32.totalorder %s33, 1
      %p434 = scmp.ne.s32.totalorder %s429, %s431
      %p435 = scmp.eq.s32.totalorder %s33, 0
      %p436 = por %p434, %p435
      %p437 = scmp.ne.s32.totalorder %s429, %s431
      %p438 = scmp.eq.s32.totalorder %s38, 1
      %p439 = por %p437, %p438
      %p440 = scmp.ne.s32.totalorder %s431, %s432
      %p441 = scmp.eq.s32.totalorder %s38, 0
      %p442 = por %p440, %p441
      %p443 = scmp.ne.s32.totalorder %s431, %s432
      %p444 = scmp.eq.s32.totalorder %s39, 1
      %p445 = por %p443, %p444
      %p447 = scmp.ne.s32.totalorder %s432, %s446
      %p448 = scmp.eq.s32.totalorder %s39, 0
      %p449 = por %p447, %p448
      %s451 = sadd.s32 %s450, 1
      %p454 = scmp.eq.s32.totalorder %s33, 1
      %p455 = scmp.ne.s32.totalorder %s450, %s452
      %p456 = scmp.eq.s32.totalorder %s33, 0
      %p457 = por %p455, %p456
      %p458 = scmp.ne.s32.totalorder %s450, %s452
      %p459 = scmp.eq.s32.totalorder %s38, 1
      %p460 = por %p458, %p459
      %p461 = scmp.ne.s32.totalorder %s452, %s453
      %p462 = scmp.eq.s32.totalorder %s38, 0
      %p463 = por %p461, %p462
      %p464 = scmp.ne.s32.totalorder %s452, %s453
      %p465 = scmp.eq.s32.totalorder %s39, 1
      %p466 = por %p464, %p465
      %p468 = scmp.ne.s32.totalorder %s453, %s467
      %p469 = scmp.eq.s32.totalorder %s39, 0
      %p470 = por %p468, %p469
      %s471 = ssub.s32 %s33, %s40
      %p472 = scmp.eq.s32.totalorder %s471, 0
      %s474 = sadd.s32 %s473, 1
      %s475 = scalar_select %p472, %s473, %s474
      %p478 = pneg %p472
      %p479 = scmp.eq.s32.totalorder %s33, 1
      %p480 = por %p478, %p479
      %p481 = scmp.ne.s32.totalorder %s473, %s476
      %p482 = scmp.eq.s32.totalorder %s33, 0
      %p483 = por %p481, %p482
      %p484 = scmp.ne.s32.totalorder %s473, %s476
      %p485 = scmp.eq.s32.totalorder %s38, 1
      %p486 = por %p484, %p485
      %p487 = scmp.ne.s32.totalorder %s476, %s477
      %p488 = scmp.eq.s32.totalorder %s38, 0
      %p489 = por %p487, %p488
      %p490 = scmp.ne.s32.totalorder %s476, %s477
      %p491 = scmp.eq.s32.totalorder %s39, 1
      %p492 = por %p490, %p491
      %p494 = scmp.ne.s32.totalorder %s477, %s493
      %p495 = scmp.eq.s32.totalorder %s39, 0
      %p496 = por %p494, %p495
      %p497 = scmp.le.s32.totalorder 1, %s33
      %p498 = scmp.lt.s32.totalorder %s33, 3
      %p499 = pnand %p497, %p498
      %p500 = pneg %p499
      // Predicated region
      $region9: #{tpu_custom_call.1} parent=5 // pred_check
        _
      $region10: #{tpu_custom_call.1} parent=5 // pred_check_branch
        %502 = sbr.rel (%p499) target = $region12
      $region11: #{tpu_custom_call.1} parent=5 // pred_region
        %s503 = ssub.s32 %s33, 1
        // Predicated region
        $region13: #{tpu_custom_call.1} parent=11 // pred_check
          %p504 = pneg %p106
        $region14: #{tpu_custom_call.1} parent=11 // pred_check_branch
          %506 = sbr.rel (%p504) target = $region16
        $region15: #{tpu_custom_call.1} parent=11 // pred_region
          _
        $region16: #{tpu_custom_call.1} parent=11 // pred_fallthru
          _
        // Predicated region
        $region17: #{tpu_custom_call.1} parent=11 // pred_check
          %p507 = pneg %p127
        $region18: #{tpu_custom_call.1} parent=11 // pred_check_branch
          %509 = sbr.rel (%p507) target = $region20
        $region19: #{tpu_custom_call.1} parent=11 // pred_region
          %s511 = ssub.s32 256, 256
          %512 = vsyncadd [#allocation5], %s511
          %s513 = sshll.u32 [#allocation4], 4
          %s514 = int_to_ptr.vmem [resolvable:$true] %s513
          %519 = dma.hbm_to_vmem [thread:$0]  %s3, 256, %s514, [#allocation5], 64, 64, 4
        $region20: #{tpu_custom_call.1} parent=11 // pred_fallthru
          _
        // Predicated region
        $region21: #{tpu_custom_call.1} parent=11 // pred_check
          %p520 = pneg %p148
        $region22: #{tpu_custom_call.1} parent=11 // pred_check_branch
          %522 = sbr.rel (%p520) target = $region24
        $region23: #{tpu_custom_call.1} parent=11 // pred_region
          %s524 = ssub.s32 32, 32
          %525 = vsyncadd [#allocation5], %s524
          %s527 = sshll.u32 [#allocation6], 4
          %s528 = int_to_ptr.vmem [resolvable:$true] %s527
          %530 = dma.hbm_to_vmem [thread:$0]  %s4, 32, %s528, [#allocation5]
        $region24: #{tpu_custom_call.1} parent=11 // pred_fallthru
          _
        // Predicated region
        $region25: #{tpu_custom_call.1} parent=11 // pred_check
          %p531 = pneg %p169
        $region26: #{tpu_custom_call.1} parent=11 // pred_check_branch
          %533 = sbr.rel (%p531) target = $region28
        $region27: #{tpu_custom_call.1} parent=11 // pred_region
          %s535 = ssub.s32 16, 16
          %536 = vsyncadd [#allocation8], %s535
          %s538 = sshll.u32 [#allocation7], 4
          %s539 = int_to_ptr.vmem [resolvable:$true] %s538
          %541 = dma.hbm_to_vmem [thread:$0]  %s5, 16, %s539, [#allocation8]
        $region28: #{tpu_custom_call.1} parent=11 // pred_fallthru
          _
        // Predicated region
        $region29: #{tpu_custom_call.1} parent=11 // pred_check
          %p542 = pneg %p190
        $region30: #{tpu_custom_call.1} parent=11 // pred_check_branch
          %544 = sbr.rel (%p542) target = $region32
        $region31: #{tpu_custom_call.1} parent=11 // pred_region
          %s546 = ssub.s32 32, 32
          %547 = vsyncadd [#allocation8], %s546
          %s549 = sshll.u32 [#allocation9], 4
          %s550 = int_to_ptr.vmem [resolvable:$true] %s549
          %552 = dma.hbm_to_vmem [thread:$0]  %s6, 32, %s550, [#allocation8]
        $region32: #{tpu_custom_call.1} parent=11 // pred_fallthru
          _
        // Predicated region
        $region33: #{tpu_custom_call.1} parent=11 // pred_check
          %p553 = pneg %p211
        $region34: #{tpu_custom_call.1} parent=11 // pred_check_branch
          %555 = sbr.rel (%p553) target = $region36
        $region35: #{tpu_custom_call.1} parent=11 // pred_region
          _
        $region36: #{tpu_custom_call.1} parent=11 // pred_fallthru
          _
        // Predicated region
        $region37: #{tpu_custom_call.1} parent=11 // pred_check
          %p556 = pneg %p232
        $region38: #{tpu_custom_call.1} parent=11 // pred_check_branch
          %558 = sbr.rel (%p556) target = $region40
        $region39: #{tpu_custom_call.1} parent=11 // pred_region
          %s560 = ssub.s32 32, 32
          %561 = vsyncadd [#allocation11], %s560
          %s563 = sshll.u32 [#allocation10], 4
          %s564 = int_to_ptr.vmem [resolvable:$true] %s563
          %566 = dma.hbm_to_vmem [thread:$0]  %s8, 32, %s564, [#allocation11]
        $region40: #{tpu_custom_call.1} parent=11 // pred_fallthru
          _
        // Predicated region
        $region41: #{tpu_custom_call.1} parent=11 // pred_check
          %p567 = pneg %p253
        $region42: #{tpu_custom_call.1} parent=11 // pred_check_branch
          %569 = sbr.rel (%p567) target = $region44
        $region43: #{tpu_custom_call.1} parent=11 // pred_region
          _
        $region44: #{tpu_custom_call.1} parent=11 // pred_fallthru
          _
        // Predicated region
        $region45: #{tpu_custom_call.1} parent=11 // pred_check
          %p570 = pneg %p274
        $region46: #{tpu_custom_call.1} parent=11 // pred_check_branch
          %572 = sbr.rel (%p570) target = $region48
        $region47: #{tpu_custom_call.1} parent=11 // pred_region
          %s574 = ssub.s32 16, 16
          %575 = vsyncadd [#allocation11], %s574
          %s577 = sshll.u32 [#allocation12], 4
          %s578 = int_to_ptr.vmem [resolvable:$true] %s577
          %580 = dma.hbm_to_vmem [thread:$0]  %s10, 16, %s578, [#allocation11]
        $region48: #{tpu_custom_call.1} parent=11 // pred_fallthru
          _
        // Predicated region
        $region49: #{tpu_custom_call.1} parent=11 // pred_check
          %p581 = pneg %p295
        $region50: #{tpu_custom_call.1} parent=11 // pred_check_branch
          %583 = sbr.rel (%p581) target = $region52
        $region51: #{tpu_custom_call.1} parent=11 // pred_region
          _
        $region52: #{tpu_custom_call.1} parent=11 // pred_fallthru
          _
        // Predicated region
        $region53: #{tpu_custom_call.1} parent=11 // pred_check
          %p584 = pneg %p316
        $region54: #{tpu_custom_call.1} parent=11 // pred_check_branch
          %586 = sbr.rel (%p584) target = $region56
        $region55: #{tpu_custom_call.1} parent=11 // pred_region
          %s588 = ssub.s32 16, 16
          %589 = vsyncadd [#allocation14], %s588
          %s591 = sshll.u32 [#allocation13], 4
          %s592 = int_to_ptr.vmem [resolvable:$true] %s591
          %594 = dma.hbm_to_vmem [thread:$0]  %s12, 16, %s592, [#allocation14]
        $region56: #{tpu_custom_call.1} parent=11 // pred_fallthru
          _
        // Predicated region
        $region57: #{tpu_custom_call.1} parent=11 // pred_check
          %p595 = pneg %p337
        $region58: #{tpu_custom_call.1} parent=11 // pred_check_branch
          %597 = sbr.rel (%p595) target = $region60
        $region59: #{tpu_custom_call.1} parent=11 // pred_region
          _
        $region60: #{tpu_custom_call.1} parent=11 // pred_fallthru
          _
        // Predicated region
        $region61: #{tpu_custom_call.1} parent=11 // pred_check
          %p598 = pneg %p358
        $region62: #{tpu_custom_call.1} parent=11 // pred_check_branch
          %600 = sbr.rel (%p598) target = $region64
        $region63: #{tpu_custom_call.1} parent=11 // pred_region
          _
        $region64: #{tpu_custom_call.1} parent=11 // pred_fallthru
          _
        // Predicated region
        $region65: #{tpu_custom_call.1} parent=11 // pred_check
          %p601 = pneg %p379
        $region66: #{tpu_custom_call.1} parent=11 // pred_check_branch
          %603 = sbr.rel (%p601) target = $region68
        $region67: #{tpu_custom_call.1} parent=11 // pred_region
          _
        $region68: #{tpu_custom_call.1} parent=11 // pred_fallthru
          _
        // Predicated region
        $region69: #{tpu_custom_call.1} parent=11 // pred_check
          %p604 = pneg %p400
        $region70: #{tpu_custom_call.1} parent=11 // pred_check_branch
          %606 = sbr.rel (%p604) target = $region72
        $region71: #{tpu_custom_call.1} parent=11 // pred_region
          %s608 = ssub.s32 2048, 2048
          %609 = vsyncadd [#allocation14], %s608
          %s610 = sshll.u32 [#allocation15], 4
          %s611 = int_to_ptr.vmem [resolvable:$true] %s610
          %616 = dma.hbm_to_vmem [thread:$0]  %s16, 2048, %s611, [#allocation14], 64, 64, 4
        $region72: #{tpu_custom_call.1} parent=11 // pred_fallthru
          _
        // Predicated region
        $region73: #{tpu_custom_call.1} parent=11 // pred_check
          %p617 = pneg %p421
        $region74: #{tpu_custom_call.1} parent=11 // pred_check_branch
          %619 = sbr.rel (%p617) target = $region76
        $region75: #{tpu_custom_call.1} parent=11 // pred_region
          _
        $region76: #{tpu_custom_call.1} parent=11 // pred_fallthru
          _
        // Predicated region
        $region77: #{tpu_custom_call.1} parent=11 // pred_check
          %p620 = pneg %p442
        $region78: #{tpu_custom_call.1} parent=11 // pred_check_branch
          %622 = sbr.rel (%p620) target = $region80
        $region79: #{tpu_custom_call.1} parent=11 // pred_region
          _
        $region80: #{tpu_custom_call.1} parent=11 // pred_fallthru
          _
        // Predicated region
        $region81: #{tpu_custom_call.1} parent=11 // pred_check
          %p623 = pneg %p463
        $region82: #{tpu_custom_call.1} parent=11 // pred_check_branch
          %625 = sbr.rel (%p623) target = $region84
        $region83: #{tpu_custom_call.1} parent=11 // pred_region
          _
        $region84: #{tpu_custom_call.1} parent=11 // pred_fallthru
          _
      $region12: #{tpu_custom_call.1} parent=5 // pred_fallthru
        _
      %p626 = scmp.lt.s32.totalorder %s33, 2
      // Predicated region
      $region85: #{tpu_custom_call.1} parent=5 // pred_check
        %p627 = pneg %p626
      $region86: #{tpu_custom_call.1} parent=5 // pred_check_branch
        %629 = sbr.rel (%p627) target = $region88
      $region87: #{tpu_custom_call.1} parent=5 // pred_region
        // Predicated region
        $region89: #{tpu_custom_call.1} parent=87 // pred_check
          %p630 = pneg %p53
        $region90: #{tpu_custom_call.1} parent=87 // pred_check_branch
          %632 = sbr.rel (%p630) target = $region92
        $region91: #{tpu_custom_call.1} parent=87 // pred_region
          %s633 = sand.u32 %s43, 1
          %s634 = scalar_lea.sflag [#allocation3], %s633
          %s635 = sand.u32 %s43, 1
          %s636 = smul.addr %s635, 4
          %s637 = scalar_lea.vmem [#allocation2], %s636
          %s639 = ssub.s32 64, 64
          %640 = vsyncadd %s634, %s639
          %s641 = smul.addr %s33, 64
          %s642 = scalar_lea.hbm %s0, %s641
          %s644 = sshll.u32 %s637, 4
          %s645 = int_to_ptr.vmem [resolvable:$true] %s644
          %647 = dma.hbm_to_vmem [thread:$0]  %s642, 64, %s645, %s634
        $region92: #{tpu_custom_call.1} parent=87 // pred_fallthru
          _
        // Predicated region
        $region93: #{tpu_custom_call.1} parent=87 // pred_check
          %p648 = pneg %p79
        $region94: #{tpu_custom_call.1} parent=87 // pred_check_branch
          %650 = sbr.rel (%p648) target = $region96
        $region95: #{tpu_custom_call.1} parent=87 // pred_region
          %p651 = scmp.lt.s32.totalorder %s33, 1
          %s652 = scalar_select %p651, %s33, 1
          %s653 = smul.addr %s652, 4
          %s654 = scalar_lea.vmem %s1, %s653
        $region96: #{tpu_custom_call.1} parent=87 // pred_fallthru
          _
      $region88: #{tpu_custom_call.1} parent=5 // pred_fallthru
        _
      %p655 = scmp.le.s32.totalorder 1, %s33
      %p656 = scmp.lt.s32.totalorder %s33, 3
      %p657 = pnand %p655, %p656
      %p658 = pneg %p657
      // Predicated region
      $region97: #{tpu_custom_call.1} parent=5 // pred_check
        _
      $region98: #{tpu_custom_call.1} parent=5 // pred_check_branch
        %660 = sbr.rel (%p657) target = $region100
      $region99: #{tpu_custom_call.1} parent=5 // pred_region
        %s661 = ssub.s32 %s33, 1
        %s662 = sand.u32 %s46, 1
        %s663 = scalar_lea.sflag [#allocation3], %s662
        %s664 = sand.u32 %s46, 1
        %s665 = smul.addr %s664, 4
        %s666 = scalar_lea.vmem [#allocation2], %s665
        // Predicated region
        $region101: #{tpu_custom_call.1} parent=99 // pred_check
          %p667 = pneg %p59
        $region102: #{tpu_custom_call.1} parent=99 // pred_check_branch
          %669 = sbr.rel (%p667) target = $region104
        $region103: #{tpu_custom_call.1} parent=99 // pred_region
          %670 = dma.done %s663, 64
        $region104: #{tpu_custom_call.1} parent=99 // pred_fallthru
          _
        // Predicated region
        $region105: #{tpu_custom_call.1} parent=99 // pred_check
          %p671 = pneg %p127
        $region106: #{tpu_custom_call.1} parent=99 // pred_check_branch
          %673 = sbr.rel (%p671) target = $region108
        $region107: #{tpu_custom_call.1} parent=99 // pred_region
          %674 = dma.done [#allocation5], 256
        $region108: #{tpu_custom_call.1} parent=99 // pred_fallthru
          _
        // Predicated region
        $region109: #{tpu_custom_call.1} parent=99 // pred_check
          %p675 = pneg %p148
        $region110: #{tpu_custom_call.1} parent=99 // pred_check_branch
          %677 = sbr.rel (%p675) target = $region112
        $region111: #{tpu_custom_call.1} parent=99 // pred_region
          %678 = dma.done [#allocation5], 32
        $region112: #{tpu_custom_call.1} parent=99 // pred_fallthru
          _
        // Predicated region
        $region113: #{tpu_custom_call.1} parent=99 // pred_check
          %p679 = pneg %p169
        $region114: #{tpu_custom_call.1} parent=99 // pred_check_branch
          %681 = sbr.rel (%p679) target = $region116
        $region115: #{tpu_custom_call.1} parent=99 // pred_region
          %682 = dma.done [#allocation8], 16
        $region116: #{tpu_custom_call.1} parent=99 // pred_fallthru
          _
        // Predicated region
        $region117: #{tpu_custom_call.1} parent=99 // pred_check
          %p683 = pneg %p190
        $region118: #{tpu_custom_call.1} parent=99 // pred_check_branch
          %685 = sbr.rel (%p683) target = $region120
        $region119: #{tpu_custom_call.1} parent=99 // pred_region
          %686 = dma.done [#allocation8], 32
        $region120: #{tpu_custom_call.1} parent=99 // pred_fallthru
          _
        // Predicated region
        $region121: #{tpu_custom_call.1} parent=99 // pred_check
          %p687 = pneg %p232
        $region122: #{tpu_custom_call.1} parent=99 // pred_check_branch
          %689 = sbr.rel (%p687) target = $region124
        $region123: #{tpu_custom_call.1} parent=99 // pred_region
          %690 = dma.done [#allocation11], 32
        $region124: #{tpu_custom_call.1} parent=99 // pred_fallthru
          _
        // Predicated region
        $region125: #{tpu_custom_call.1} parent=99 // pred_check
          %p691 = pneg %p274
        $region126: #{tpu_custom_call.1} parent=99 // pred_check_branch
          %693 = sbr.rel (%p691) target = $region128
        $region127: #{tpu_custom_call.1} parent=99 // pred_region
          %694 = dma.done [#allocation11], 16
        $region128: #{tpu_custom_call.1} parent=99 // pred_fallthru
          _
        // Predicated region
        $region129: #{tpu_custom_call.1} parent=99 // pred_check
          %p695 = pneg %p316
        $region130: #{tpu_custom_call.1} parent=99 // pred_check_branch
          %697 = sbr.rel (%p695) target = $region132
        $region131: #{tpu_custom_call.1} parent=99 // pred_region
          %698 = dma.done [#allocation14], 16
        $region132: #{tpu_custom_call.1} parent=99 // pred_fallthru
          _
        // Predicated region
        $region133: #{tpu_custom_call.1} parent=99 // pred_check
          %p699 = pneg %p400
        $region134: #{tpu_custom_call.1} parent=99 // pred_check_branch
          %701 = sbr.rel (%p699) target = $region136
        $region135: #{tpu_custom_call.1} parent=99 // pred_region
          %702 = dma.done [#allocation14], 2048
        $region136: #{tpu_custom_call.1} parent=99 // pred_fallthru
          _
        %s703 = sand.u32 %s46, 1
        %s704 = scalar_lea.sflag [#allocation3], %s703
        %s705 = sand.u32 %s46, 1
        %s706 = smul.addr %s705, 4
        %s707 = scalar_lea.vmem [#allocation2], %s706
        %p708 = pneg %p59
        %p709 = pneg %p56
        %p710 = scmp.lt.s32.totalorder %s38, 1
        %s711 = scalar_select %p710, %s38, 1
        %s712 = smul.addr %s711, 4
        %s713 = scalar_lea.vmem %s1, %s712
        %p714 = pneg %p85
        %p715 = pneg %p82
        %p716 = pneg %p106
        %p717 = pneg %p103
        %p718 = pneg %p127
        %p719 = pneg %p124
        %p720 = pneg %p148
        %p721 = pneg %p145
        %p722 = pneg %p169
        %p723 = pneg %p166
        %p724 = pneg %p190
        %p725 = pneg %p187
        %p726 = pneg %p211
        %p727 = pneg %p208
        %p728 = pneg %p232
        %p729 = pneg %p229
        %p730 = pneg %p253
        %p731 = pneg %p250
        %p732 = pneg %p274
        %p733 = pneg %p271
        %p734 = pneg %p295
        %p735 = pneg %p292
        %p736 = pneg %p316
        %p737 = pneg %p313
        %p738 = pneg %p337
        %p739 = pneg %p334
        %p740 = pneg %p358
        %p741 = pneg %p355
        %p742 = pneg %p379
        %p743 = pneg %p376
        %p744 = pneg %p400
        %p745 = pneg %p397
        %p746 = pneg %p421
        %p747 = pneg %p418
        %p748 = pneg %p442
        %p749 = pneg %p439
        %p750 = pneg %p463
        %p751 = pneg %p460
        %p752 = pneg %p489
        %p753 = pneg %p486
        %s754 = smul.u32 16, %s38
        %p755 = scmp.lt.s32.totalorder %s754, 31
        %s756 = scalar_select %p755, %s754, 31
        %s757 = smul.addr %s756, 8
        %s758 = scalar_lea.vmem %s20, %s757
        %p759 = scmp.lt.s32.totalorder %s38, 1
        %s760 = scalar_select %p759, %s38, 1
        %s761 = smul.addr %s760, 4
        %s762 = scalar_lea.vmem %s1, %s761
        %s763 = smul.u32 16, %s38
        %p764 = scmp.lt.s32.totalorder %s763, 31
        %s765 = scalar_select %p764, %s763, 31
        %s766 = smul.addr %s765, 8
        %s767 = scalar_lea.vmem %s20, %s766
        %s768 = smul.u32 16, %s38
        %v770 = vld [vmem:[%s666] sm:$0xf]
        %v771 = vld [vmem:[#allocation4] sm:$0xf]
        %v772 = vld [vmem:[#allocation4 + $0x4] sm:$0xf]
        %v773 = vld [vmem:[#allocation4 + $0x8] sm:$0xf]
        %v774 = vld [vmem:[#allocation4 + $0xc] sm:$0xf]
        %v775 = vld [vmem:[%s762] sm:$0xf]
        %v776 = vld [vmem:[#allocation6] sm:$0x3]
        %vm777 = vcmask 23552
        %v779 = vsel %vm777, %v775, 0
        %vm781 = vcmask 1040384
        %vm782 = vcmask 1041408
        %v783 = vsel %vm781, 4294967295, 65535
        %v784 = vsel %vm782, %v783, 0
        %v786 = vand.u32 %v776, %v784
        %788 = vmatprep.subr.bf16.mxu0 0
        %789 = vmatpush1.bf16.msra.mxu0 %v786
        %790 = vmatprep.subr.bf16.mxu0 0
        %791 = vmatpush1.bf16.msra.mxu0 0
        %792 = vmatprep.subr.bf16.mxu0 0
        %793 = vmatpush1.bf16.msra.mxu0 0
        %794 = vmatprep.subr.bf16.mxu0 0
        %795 = vmatpush1.bf16.msra.mxu0 0
        %796 = vmatprep.subr.bf16.mxu0 0
        %797 = vmatpush1.bf16.msra.mxu0 0
        %798 = vmatprep.subr.bf16.mxu0 0
        %799 = vmatpush1.bf16.msra.mxu0 0
        %800 = vmatprep.subr.bf16.mxu0 0
        %801 = vmatpush1.bf16.msra.mxu0 0
        %802 = vmatprep.subr.bf16.mxu0 0
        %803 = vmatpush1.bf16.msra.mxu0 0
        %804 = vmatprep.subr.bf16.mxu0 0
        %805 = vmatpush1.bf16.msra.mxu0 0
        %806 = vmatprep.subr.bf16.mxu0 0
        %807 = vmatpush1.bf16.msra.mxu0 0
        %808 = vmatprep.subr.bf16.mxu0 0
        %809 = vmatpush1.bf16.msra.mxu0 0
        %810 = vmatprep.subr.bf16.mxu0 0
        %811 = vmatpush1.bf16.msra.mxu0 0
        %812 = vmatprep.subr.bf16.mxu0 0
        %813 = vmatpush1.bf16.msra.mxu0 0
        %814 = vmatprep.subr.bf16.mxu0 0
        %815 = vmatpush1.bf16.msra.mxu0 0
        %816 = vmatprep.subr.bf16.mxu0 0
        %817 = vmatpush1.bf16.msra.mxu0 0
        %818 = vmatprep.subr.bf16.mxu0 0
        %819 = vmatpush1.bf16.msra.mxu0 0
        %820 = vmatprep.mubr.bf16.mxu0 0
        %821 = vmatmul.mubr.bf16.gmra.mrb[0].mxu0 %v779
        %v822 = vpop.f32.mrb[0].mxu0
        %v823 = vadd.f32 0.0, %v822
        %v824 = vpop.f32.mrb[0].mxu0
        %v825 = vpop.f32.mrb[0].mxu0
        %v826 = vpop.f32.mrb[0].mxu0
        %827 = vdwg.mxu0
        %v832 = vunpack.c.l.b16 %v771
        %v833 = vunpack.c.l.b16 %v772
        %v834 = vunpack.c.l.b16 %v773
        %v835 = vunpack.c.l.b16 %v774
        %v836 = vpack.c.b16 %v833, %v832
        %v837 = vpack.c.b16 %v835, %v834
        %vm840 = vcmask 261120
        %v842 = vsel %vm840, %v770, 0
        %844 = vmatprep.subr.bf16.mxu0 0
        %845 = vmatpush1.bf16.msra.mxu0 %v836
        %846 = vmatprep.subr.bf16.mxu0 0
        %847 = vmatpush1.bf16.msra.mxu0 %v837
        %848 = vmatprep.subr.bf16.mxu0 0
        %849 = vmatpush1.bf16.msra.mxu0 0
        %850 = vmatprep.subr.bf16.mxu0 0
        %851 = vmatpush1.bf16.msra.mxu0 0
        %852 = vmatprep.subr.bf16.mxu0 0
        %853 = vmatpush1.bf16.msra.mxu0 0
        %854 = vmatprep.subr.bf16.mxu0 0
        %855 = vmatpush1.bf16.msra.mxu0 0
        %856 = vmatprep.subr.bf16.mxu0 0
        %857 = vmatpush1.bf16.msra.mxu0 0
        %858 = vmatprep.subr.bf16.mxu0 0
        %859 = vmatpush1.bf16.msra.mxu0 0
        %860 = vmatprep.subr.bf16.mxu0 0
        %861 = vmatpush1.bf16.msra.mxu0 0
        %862 = vmatprep.subr.bf16.mxu0 0
        %863 = vmatpush1.bf16.msra.mxu0 0
        %864 = vmatprep.subr.bf16.mxu0 0
        %865 = vmatpush1.bf16.msra.mxu0 0
        %866 = vmatprep.subr.bf16.mxu0 0
        %867 = vmatpush1.bf16.msra.mxu0 0
        %868 = vmatprep.subr.bf16.mxu0 0
        %869 = vmatpush1.bf16.msra.mxu0 0
        %870 = vmatprep.subr.bf16.mxu0 0
        %871 = vmatpush1.bf16.msra.mxu0 0
        %872 = vmatprep.subr.bf16.mxu0 0
        %873 = vmatpush1.bf16.msra.mxu0 0
        %874 = vmatprep.subr.bf16.mxu0 0
        %875 = vmatpush1.bf16.msra.mxu0 0
        %876 = vmatprep.mubr.bf16.mxu0 0
        %877 = vmatmul.mubr.bf16.gmra.mrb[0].mxu0 %v842
        %v878 = vpop.f32.mrb[0].mxu0
        %v879 = vadd.f32 %v823, %v878
        %v880 = vpop.f32.mrb[0].mxu0
        %v881 = vpop.f32.mrb[0].mxu0
        %v882 = vpop.f32.mrb[0].mxu0
        %883 = vdwg.mxu0
        %v884 = vld [vmem:[#allocation7] sm:$0x1]
        %v886 = vlaneseq
        %v887 = vshrl.u32 %v886, 7
        %v888 = vsub.s32 0, %v887
        %v889 = vrot.slane %v884, %v888
        %v891 = vadd.f32 %v879, %v889
        %v892 = vpack.c.bf16 %v891, %v891
        %v893 = vld [vmem:[%s2] sm:$0xf]
        %v894 = vld [vmem:[%s2 + $0x4] sm:$0xf]
        %v895 = vld [vmem:[#allocation9] sm:$0x3]
        %v896 = vld [vmem:[#allocation10] sm:$0x3]
        %v898 = vlaneseq
        %v899 = vshrl.u32 %v898, 7
        %v900 = vsub.s32 0, %v899
        %v901 = vrot.slane %v896, %v900
        %v902 = vlaneseq
        %v903 = vshrl.u32 %v902, 7
        %v904 = vsub.s32 1, %v903
        %v905 = vrot.slane %v896, %v904
        %v910 = vunpack.c.l.b16 %v893
        %v911 = vunpack.c.l.b16 %v894
        %v912 = vpack.c.b16 %v911, %v910
        %v915 = vunpack.c.l.s4 1966171168
        %v916 = vunpack.c.0.s8 %v915
        %v917 = vlaneseq
        %v918 = vshrl.u32 %v917, 7
        %v919 = vsub.s32 %v916, %v918
        %v920 = vrot.slane %v895, %v919
        %v921 = vcombine.high %v920, %v920
        %v923 = vunpack.c.l.s4 1966171168
        %v924 = vunpack.c.0.s8 %v923
        %v925 = vlaneseq
        %v926 = vshrl.u32 %v925, 7
        %v927 = vsub.s32 %v924, %v926
        %v928 = vrot.slane %v920, %v927
        %v930 = vunpack.c.l.s4 1966171168
        %v931 = vunpack.c.0.s8 %v930
        %v932 = vlaneseq
        %v933 = vshrl.u32 %v932, 7
        %v934 = vsub.s32 %v931, %v933
        %v935 = vrot.slane %v921, %v934
        %vm936 = vcmask 15360
        %v938 = vsel %vm936, %v912, 0
        %v941 = vsel %vm781, %v928, 0
        %v944 = vsel %vm781, %v935, 0
        %946 = vmatprep.subr.bf16.mxu0 %v944
        %947 = vmatpush1.bf16.msra.mxu0 %v941
        %948 = vmatprep.subr.bf16.mxu0 0
        %949 = vmatpush1.bf16.msra.mxu0 0
        %950 = vmatprep.subr.bf16.mxu0 0
        %951 = vmatpush1.bf16.msra.mxu0 0
        %952 = vmatprep.subr.bf16.mxu0 0
        %953 = vmatpush1.bf16.msra.mxu0 0
        %954 = vmatprep.subr.bf16.mxu0 0
        %955 = vmatpush1.bf16.msra.mxu0 0
        %956 = vmatprep.subr.bf16.mxu0 0
        %957 = vmatpush1.bf16.msra.mxu0 0
        %958 = vmatprep.subr.bf16.mxu0 0
        %959 = vmatpush1.bf16.msra.mxu0 0
        %960 = vmatprep.subr.bf16.mxu0 0
        %961 = vmatpush1.bf16.msra.mxu0 0
        %962 = vmatprep.subr.bf16.mxu0 0
        %963 = vmatpush1.bf16.msra.mxu0 0
        %964 = vmatprep.subr.bf16.mxu0 0
        %965 = vmatpush1.bf16.msra.mxu0 0
        %966 = vmatprep.subr.bf16.mxu0 0
        %967 = vmatpush1.bf16.msra.mxu0 0
        %968 = vmatprep.subr.bf16.mxu0 0
        %969 = vmatpush1.bf16.msra.mxu0 0
        %970 = vmatprep.subr.bf16.mxu0 0
        %971 = vmatpush1.bf16.msra.mxu0 0
        %972 = vmatprep.subr.bf16.mxu0 0
        %973 = vmatpush1.bf16.msra.mxu0 0
        %974 = vmatprep.subr.bf16.mxu0 0
        %975 = vmatpush1.bf16.msra.mxu0 0
        %976 = vmatprep.subr.bf16.mxu0 0
        %977 = vmatpush1.bf16.msra.mxu0 0
        %978 = vmatprep.mubr.bf16.mxu0 0
        %979 = vmatmul.mubr.bf16.gmra.mrb[0].mxu0 %v938
        %v980 = vpop.f32.mrb[0].mxu0
        %v981 = vadd.f32 %v901, %v980
        %v982 = vpop.f32.mrb[0].mxu0
        %v983 = vadd.f32 %v905, %v982
        %v984 = vpop.f32.mrb[0].mxu0
        %v985 = vadd.f32 %v901, %v984
        %v986 = vpop.f32.mrb[0].mxu0
        %v987 = vadd.f32 %v905, %v986
        %988 = vdwg.mxu0
        %v989 = vld [vmem:[%s7] sm:$0xff]
        %v990 = vld [vmem:[%s7 + $0x8] sm:$0xff]
        %v991 = vld [vmem:[%s7 + $0x10] sm:$0xff]
        %v992 = vld [vmem:[%s7 + $0x18] sm:$0xff]
        %v997 = vunpack.c.l.b16 %v989
        %v998 = vunpack.c.h.b16 %v989
        %v999 = vunpack.c.l.b16 %v990
        %v1000 = vunpack.c.h.b16 %v990
        %v1001 = vunpack.c.l.b16 %v991
        %v1002 = vunpack.c.h.b16 %v991
        %v1003 = vunpack.c.l.b16 %v992
        %v1004 = vunpack.c.h.b16 %v992
        %v1005 = vpack.c.b16 %v999, %v997
        %v1006 = vpack.c.b16 %v1000, %v998
        %v1007 = vpack.c.b16 %v1003, %v1001
        %v1008 = vpack.c.b16 %v1004, %v1002
        %v1014 = vsel %vm840, %v892, 0
        %1016 = vmatprep.subr.bf16.mxu0 %v1006
        %1017 = vmatpush1.bf16.msra.mxu0 %v1005
        %1018 = vmatprep.subr.bf16.mxu0 %v1008
        %1019 = vmatpush1.bf16.msra.mxu0 %v1007
        %1020 = vmatprep.subr.bf16.mxu0 0
        %1021 = vmatpush1.bf16.msra.mxu0 0
        %1022 = vmatprep.subr.bf16.mxu0 0
        %1023 = vmatpush1.bf16.msra.mxu0 0
        %1024 = vmatprep.subr.bf16.mxu0 0
        %1025 = vmatpush1.bf16.msra.mxu0 0
        %1026 = vmatprep.subr.bf16.mxu0 0
        %1027 = vmatpush1.bf16.msra.mxu0 0
        %1028 = vmatprep.subr.bf16.mxu0 0
        %1029 = vmatpush1.bf16.msra.mxu0 0
        %1030 = vmatprep.subr.bf16.mxu0 0
        %1031 = vmatpush1.bf16.msra.mxu0 0
        %1032 = vmatprep.subr.bf16.mxu0 0
        %1033 = vmatpush1.bf16.msra.mxu0 0
        %1034 = vmatprep.subr.bf16.mxu0 0
        %1035 = vmatpush1.bf16.msra.mxu0 0
        %1036 = vmatprep.subr.bf16.mxu0 0
        %1037 = vmatpush1.bf16.msra.mxu0 0
        %1038 = vmatprep.subr.bf16.mxu0 0
        %1039 = vmatpush1.bf16.msra.mxu0 0
        %1040 = vmatprep.subr.bf16.mxu0 0
        %1041 = vmatpush1.bf16.msra.mxu0 0
        %1042 = vmatprep.subr.bf16.mxu0 0
        %1043 = vmatpush1.bf16.msra.mxu0 0
        %1044 = vmatprep.subr.bf16.mxu0 0
        %1045 = vmatpush1.bf16.msra.mxu0 0
        %1046 = vmatprep.subr.bf16.mxu0 0
        %1047 = vmatpush1.bf16.msra.mxu0 0
        %1048 = vmatprep.mubr.bf16.mxu0 0
        %1049 = vmatmul.mubr.bf16.gmra.mrb[0].mxu0 %v1014
        %v1050 = vpop.f32.mrb[0].mxu0
        %v1051 = vadd.f32 0.0, %v1050
        %v1052 = vpop.f32.mrb[0].mxu0
        %v1053 = vadd.f32 0.0, %v1052
        %v1054 = vpop.f32.mrb[0].mxu0
        %v1055 = vpop.f32.mrb[0].mxu0
        %1056 = vdwg.mxu0
        %v1059 = vcombine.low %v1051, %v1053
        %v1060 = vcombine.high %v1051, %v1053
        %v1062 = vunpack.c.l.s4 1966171168
        %v1063 = vunpack.c.0.s8 %v1062
        %v1064 = vlaneseq
        %v1065 = vshrl.u32 %v1064, 7
        %v1066 = vsub.s32 %v1063, %v1065
        %v1067 = vrot.slane %v1059, %v1066
        %v1069 = vunpack.c.l.s4 1966171168
        %v1070 = vunpack.c.0.s8 %v1069
        %v1071 = vlaneseq
        %v1072 = vshrl.u32 %v1071, 7
        %v1073 = vsub.s32 %v1070, %v1072
        %v1074 = vrot.slane %v1060, %v1073
        %v1075 = vcombine.high %v1067, %v1067
        %v1076 = vcombine.high %v1074, %v1074
        %v1078 = vunpack.c.l.s4 1966171168
        %v1079 = vunpack.c.0.s8 %v1078
        %v1080 = vlaneseq
        %v1081 = vshrl.u32 %v1080, 7
        %v1082 = vsub.s32 %v1079, %v1081
        %v1083 = vrot.slane %v1067, %v1082
        %v1085 = vunpack.c.l.s4 1966171168
        %v1086 = vunpack.c.0.s8 %v1085
        %v1087 = vlaneseq
        %v1088 = vshrl.u32 %v1087, 7
        %v1089 = vsub.s32 %v1086, %v1088
        %v1090 = vrot.slane %v1074, %v1089
        %v1092 = vunpack.c.l.s4 1966171168
        %v1093 = vunpack.c.0.s8 %v1092
        %v1094 = vlaneseq
        %v1095 = vshrl.u32 %v1094, 7
        %v1096 = vsub.s32 %v1093, %v1095
        %v1097 = vrot.slane %v1075, %v1096
        %v1099 = vunpack.c.l.s4 1966171168
        %v1100 = vunpack.c.0.s8 %v1099
        %v1101 = vlaneseq
        %v1102 = vshrl.u32 %v1101, 7
        %v1103 = vsub.s32 %v1100, %v1102
        %v1104 = vrot.slane %v1076, %v1103
        %v1105 = vcombine.high %v1083, %v1083
        %v1106 = vcombine.high %v1090, %v1090
        %v1107 = vcombine.high %v1097, %v1097
        %v1108 = vcombine.high %v1104, %v1104
        %v1109 = vlaneseq
        %v1110 = vshrl.u32 %v1109, 7
        %v1111 = vsub.s32 0, %v1110
        %v1112 = vrot.slane %v1083, %v1111
        %v1113 = vlaneseq
        %v1114 = vshrl.u32 %v1113, 7
        %v1115 = vsub.s32 1, %v1114
        %v1116 = vrot.slane %v1083, %v1115
        %v1117 = vlaneseq
        %v1118 = vshrl.u32 %v1117, 7
        %v1119 = vsub.s32 0, %v1118
        %v1120 = vrot.slane %v1097, %v1119
        %v1121 = vlaneseq
        %v1122 = vshrl.u32 %v1121, 7
        %v1123 = vsub.s32 1, %v1122
        %v1124 = vrot.slane %v1097, %v1123
        %v1125 = vlaneseq
        %v1126 = vshrl.u32 %v1125, 7
        %v1127 = vsub.s32 0, %v1126
        %v1128 = vrot.slane %v1105, %v1127
        %v1129 = vlaneseq
        %v1130 = vshrl.u32 %v1129, 7
        %v1131 = vsub.s32 1, %v1130
        %v1132 = vrot.slane %v1105, %v1131
        %v1133 = vlaneseq
        %v1134 = vshrl.u32 %v1133, 7
        %v1135 = vsub.s32 0, %v1134
        %v1136 = vrot.slane %v1107, %v1135
        %v1137 = vlaneseq
        %v1138 = vshrl.u32 %v1137, 7
        %v1139 = vsub.s32 1, %v1138
        %v1140 = vrot.slane %v1107, %v1139
        %v1141 = vlaneseq
        %v1142 = vshrl.u32 %v1141, 7
        %v1143 = vsub.s32 0, %v1142
        %v1144 = vrot.slane %v1090, %v1143
        %v1145 = vlaneseq
        %v1146 = vshrl.u32 %v1145, 7
        %v1147 = vsub.s32 1, %v1146
        %v1148 = vrot.slane %v1090, %v1147
        %v1149 = vlaneseq
        %v1150 = vshrl.u32 %v1149, 7
        %v1151 = vsub.s32 0, %v1150
        %v1152 = vrot.slane %v1104, %v1151
        %v1153 = vlaneseq
        %v1154 = vshrl.u32 %v1153, 7
        %v1155 = vsub.s32 1, %v1154
        %v1156 = vrot.slane %v1104, %v1155
        %v1157 = vlaneseq
        %v1158 = vshrl.u32 %v1157, 7
        %v1159 = vsub.s32 0, %v1158
        %v1160 = vrot.slane %v1106, %v1159
        %v1161 = vlaneseq
        %v1162 = vshrl.u32 %v1161, 7
        %v1163 = vsub.s32 1, %v1162
        %v1164 = vrot.slane %v1106, %v1163
        %v1165 = vlaneseq
        %v1166 = vshrl.u32 %v1165, 7
        %v1167 = vsub.s32 0, %v1166
        %v1168 = vrot.slane %v1108, %v1167
        %v1169 = vlaneseq
        %v1170 = vshrl.u32 %v1169, 7
        %v1171 = vsub.s32 1, %v1170
        %v1172 = vrot.slane %v1108, %v1171
        %v1189 = vadd.f32 %v1112, %v981
        %v1190 = vadd.f32 %v1116, %v983
        %v1191 = vadd.f32 %v1112, %v985
        %v1192 = vadd.f32 %v1116, %v987
        %v1193 = vadd.f32 %v1120, %v981
        %v1194 = vadd.f32 %v1124, %v983
        %v1195 = vadd.f32 %v1120, %v985
        %v1196 = vadd.f32 %v1124, %v987
        %v1197 = vadd.f32 %v1128, %v981
        %v1198 = vadd.f32 %v1132, %v983
        %v1199 = vadd.f32 %v1128, %v985
        %v1200 = vadd.f32 %v1132, %v987
        %v1201 = vadd.f32 %v1136, %v981
        %v1202 = vadd.f32 %v1140, %v983
        %v1203 = vadd.f32 %v1136, %v985
        %v1204 = vadd.f32 %v1140, %v987
        %v1205 = vadd.f32 %v1144, %v981
        %v1206 = vadd.f32 %v1148, %v983
        %v1207 = vadd.f32 %v1144, %v985
        %v1208 = vadd.f32 %v1148, %v987
        %v1209 = vadd.f32 %v1152, %v981
        %v1210 = vadd.f32 %v1156, %v983
        %v1211 = vadd.f32 %v1152, %v985
        %v1212 = vadd.f32 %v1156, %v987
        %v1213 = vadd.f32 %v1160, %v981
        %v1214 = vadd.f32 %v1164, %v983
        %v1215 = vadd.f32 %v1160, %v985
        %v1216 = vadd.f32 %v1164, %v987
        %v1217 = vadd.f32 %v1168, %v981
        %v1218 = vadd.f32 %v1172, %v983
        %v1219 = vadd.f32 %v1168, %v985
        %v1220 = vadd.f32 %v1172, %v987
        %v1221 = vmax.f32 %v1189, 0.0
        %v1222 = vmax.f32 %v1190, 0.0
        %v1223 = vmax.f32 %v1191, 0.0
        %v1224 = vmax.f32 %v1192, 0.0
        %v1225 = vmax.f32 %v1193, 0.0
        %v1226 = vmax.f32 %v1194, 0.0
        %v1227 = vmax.f32 %v1195, 0.0
        %v1228 = vmax.f32 %v1196, 0.0
        %v1229 = vmax.f32 %v1197, 0.0
        %v1230 = vmax.f32 %v1198, 0.0
        %v1231 = vmax.f32 %v1199, 0.0
        %v1232 = vmax.f32 %v1200, 0.0
        %v1233 = vmax.f32 %v1201, 0.0
        %v1234 = vmax.f32 %v1202, 0.0
        %v1235 = vmax.f32 %v1203, 0.0
        %v1236 = vmax.f32 %v1204, 0.0
        %v1237 = vmax.f32 %v1205, 0.0
        %v1238 = vmax.f32 %v1206, 0.0
        %v1239 = vmax.f32 %v1207, 0.0
        %v1240 = vmax.f32 %v1208, 0.0
        %v1241 = vmax.f32 %v1209, 0.0
        %v1242 = vmax.f32 %v1210, 0.0
        %v1243 = vmax.f32 %v1211, 0.0
        %v1244 = vmax.f32 %v1212, 0.0
        %v1245 = vmax.f32 %v1213, 0.0
        %v1246 = vmax.f32 %v1214, 0.0
        %v1247 = vmax.f32 %v1215, 0.0
        %v1248 = vmax.f32 %v1216, 0.0
        %v1249 = vmax.f32 %v1217, 0.0
        %v1250 = vmax.f32 %v1218, 0.0
        %v1251 = vmax.f32 %v1219, 0.0
        %v1252 = vmax.f32 %v1220, 0.0
        %v1253 = vpack.c.bf16 %v1223, %v1221
        %v1254 = vpack.c.bf16 %v1224, %v1222
        %v1255 = vpack.c.bf16 %v1227, %v1225
        %v1256 = vpack.c.bf16 %v1228, %v1226
        %v1257 = vpack.c.bf16 %v1231, %v1229
        %v1258 = vpack.c.bf16 %v1232, %v1230
        %v1259 = vpack.c.bf16 %v1235, %v1233
        %v1260 = vpack.c.bf16 %v1236, %v1234
        %v1261 = vpack.c.bf16 %v1239, %v1237
        %v1262 = vpack.c.bf16 %v1240, %v1238
        %v1263 = vpack.c.bf16 %v1243, %v1241
        %v1264 = vpack.c.bf16 %v1244, %v1242
        %v1265 = vpack.c.bf16 %v1247, %v1245
        %v1266 = vpack.c.bf16 %v1248, %v1246
        %v1267 = vpack.c.bf16 %v1251, %v1249
        %v1268 = vpack.c.bf16 %v1252, %v1250
        %v1269 = vld [vmem:[%s9] sm:$0xf]
        %v1270 = vld [vmem:[%s9 + $0x4] sm:$0xf]
        %v1271 = vld [vmem:[%s9 + $0x8] sm:$0xf]
        %v1272 = vld [vmem:[%s9 + $0xc] sm:$0xf]
        %v1273 = vld [vmem:[%s9 + $0x10] sm:$0xf]
        %v1274 = vld [vmem:[%s9 + $0x14] sm:$0xf]
        %v1275 = vld [vmem:[%s9 + $0x18] sm:$0xf]
        %v1276 = vld [vmem:[%s9 + $0x1c] sm:$0xf]
        %v1277 = vld [vmem:[%s9 + $0x20] sm:$0xf]
        %v1278 = vld [vmem:[%s9 + $0x24] sm:$0xf]
        %v1279 = vld [vmem:[%s9 + $0x28] sm:$0xf]
        %v1280 = vld [vmem:[%s9 + $0x2c] sm:$0xf]
        %v1281 = vld [vmem:[%s9 + $0x30] sm:$0xf]
        %v1282 = vld [vmem:[%s9 + $0x34] sm:$0xf]
        %v1283 = vld [vmem:[%s9 + $0x38] sm:$0xf]
        %v1284 = vld [vmem:[%s9 + $0x3c] sm:$0xf]
        %v1285 = vld [vmem:[%s9 + $0x40] sm:$0xf]
        %v1286 = vld [vmem:[%s9 + $0x44] sm:$0xf]
        %v1287 = vld [vmem:[%s9 + $0x48] sm:$0xf]
        %v1288 = vld [vmem:[%s9 + $0x4c] sm:$0xf]
        %v1289 = vld [vmem:[%s9 + $0x50] sm:$0xf]
        %v1290 = vld [vmem:[%s9 + $0x54] sm:$0xf]
        %v1291 = vld [vmem:[%s9 + $0x58] sm:$0xf]
        %v1292 = vld [vmem:[%s9 + $0x5c] sm:$0xf]
        %v1293 = vld [vmem:[%s9 + $0x60] sm:$0xf]
        %v1294 = vld [vmem:[%s9 + $0x64] sm:$0xf]
        %v1295 = vld [vmem:[%s9 + $0x68] sm:$0xf]
        %v1296 = vld [vmem:[%s9 + $0x6c] sm:$0xf]
        %v1297 = vld [vmem:[%s9 + $0x70] sm:$0xf]
        %v1298 = vld [vmem:[%s9 + $0x74] sm:$0xf]
        %v1299 = vld [vmem:[%s9 + $0x78] sm:$0xf]
        %v1300 = vld [vmem:[%s9 + $0x7c] sm:$0xf]
        %v1301 = vld [vmem:[#allocation12] sm:$0x1]
        %v1303 = vlaneseq
        %v1304 = vshrl.u32 %v1303, 7
        %v1305 = vsub.s32 0, %v1304
        %v1306 = vrot.slane %v1301, %v1305
        %v1340 = vunpack.c.l.b16 %v1269
        %v1341 = vunpack.c.l.b16 %v1270
        %v1342 = vunpack.c.l.b16 %v1271
        %v1343 = vunpack.c.l.b16 %v1272
        %v1344 = vunpack.c.l.b16 %v1273
        %v1345 = vunpack.c.l.b16 %v1274
        %v1346 = vunpack.c.l.b16 %v1275
        %v1347 = vunpack.c.l.b16 %v1276
        %v1348 = vunpack.c.l.b16 %v1277
        %v1349 = vunpack.c.l.b16 %v1278
        %v1350 = vunpack.c.l.b16 %v1279
        %v1351 = vunpack.c.l.b16 %v1280
        %v1352 = vunpack.c.l.b16 %v1281
        %v1353 = vunpack.c.l.b16 %v1282
        %v1354 = vunpack.c.l.b16 %v1283
        %v1355 = vunpack.c.l.b16 %v1284
        %v1356 = vunpack.c.l.b16 %v1285
        %v1357 = vunpack.c.l.b16 %v1286
        %v1358 = vunpack.c.l.b16 %v1287
        %v1359 = vunpack.c.l.b16 %v1288
        %v1360 = vunpack.c.l.b16 %v1289
        %v1361 = vunpack.c.l.b16 %v1290
        %v1362 = vunpack.c.l.b16 %v1291
        %v1363 = vunpack.c.l.b16 %v1292
        %v1364 = vunpack.c.l.b16 %v1293
        %v1365 = vunpack.c.l.b16 %v1294
        %v1366 = vunpack.c.l.b16 %v1295
        %v1367 = vunpack.c.l.b16 %v1296
        %v1368 = vunpack.c.l.b16 %v1297
        %v1369 = vunpack.c.l.b16 %v1298
        %v1370 = vunpack.c.l.b16 %v1299
        %v1371 = vunpack.c.l.b16 %v1300
        %v1372 = vpack.c.b16 %v1341, %v1340
        %v1373 = vpack.c.b16 %v1343, %v1342
        %v1374 = vpack.c.b16 %v1345, %v1344
        %v1375 = vpack.c.b16 %v1347, %v1346
        %v1376 = vpack.c.b16 %v1349, %v1348
        %v1377 = vpack.c.b16 %v1351, %v1350
        %v1378 = vpack.c.b16 %v1353, %v1352
        %v1379 = vpack.c.b16 %v1355, %v1354
        %v1380 = vpack.c.b16 %v1357, %v1356
        %v1381 = vpack.c.b16 %v1359, %v1358
        %v1382 = vpack.c.b16 %v1361, %v1360
        %v1383 = vpack.c.b16 %v1363, %v1362
        %v1384 = vpack.c.b16 %v1365, %v1364
        %v1385 = vpack.c.b16 %v1367, %v1366
        %v1386 = vpack.c.b16 %v1369, %v1368
        %v1387 = vpack.c.b16 %v1371, %v1370
        %1404 = vmatprep.subr.bf16.mxu0 0
        %1405 = vmatpush1.bf16.msra.mxu0 %v1372
        %1406 = vmatprep.subr.bf16.mxu0 0
        %1407 = vmatpush1.bf16.msra.mxu0 %v1373
        %1408 = vmatprep.subr.bf16.mxu0 0
        %1409 = vmatpush1.bf16.msra.mxu0 %v1374
        %1410 = vmatprep.subr.bf16.mxu0 0
        %1411 = vmatpush1.bf16.msra.mxu0 %v1375
        %1412 = vmatprep.subr.bf16.mxu0 0
        %1413 = vmatpush1.bf16.msra.mxu0 %v1376
        %1414 = vmatprep.subr.bf16.mxu0 0
        %1415 = vmatpush1.bf16.msra.mxu0 %v1377
        %1416 = vmatprep.subr.bf16.mxu0 0
        %1417 = vmatpush1.bf16.msra.mxu0 %v1378
        %1418 = vmatprep.subr.bf16.mxu0 0
        %1419 = vmatpush1.bf16.msra.mxu0 %v1379
        %1420 = vmatprep.subr.bf16.mxu0 0
        %1421 = vmatpush1.bf16.msra.mxu0 %v1380
        %1422 = vmatprep.subr.bf16.mxu0 0
        %1423 = vmatpush1.bf16.msra.mxu0 %v1381
        %1424 = vmatprep.subr.bf16.mxu0 0
        %1425 = vmatpush1.bf16.msra.mxu0 %v1382
        %1426 = vmatprep.subr.bf16.mxu0 0
        %1427 = vmatpush1.bf16.msra.mxu0 %v1383
        %1428 = vmatprep.subr.bf16.mxu0 0
        %1429 = vmatpush1.bf16.msra.mxu0 %v1384
        %1430 = vmatprep.subr.bf16.mxu0 0
        %1431 = vmatpush1.bf16.msra.mxu0 %v1385
        %1432 = vmatprep.subr.bf16.mxu0 0
        %1433 = vmatpush1.bf16.msra.mxu0 %v1386
        %1434 = vmatprep.subr.bf16.mxu0 0
        %1435 = vmatpush1.bf16.msra.mxu0 %v1387
        %1436 = vmatprep.mubr.bf16.mxu0 %v1254
        %1437 = vmatmul.mubr.bf16.gmra.mrb[0].mxu0 %v1253
        %v1438 = vpop.f32.mrb[0].mxu0
        %v1439 = vadd.f32 %v1306, %v1438
        %v1440 = vpop.f32.mrb[0].mxu0
        %v1441 = vpop.f32.mrb[0].mxu0
        %v1442 = vadd.f32 %v1306, %v1441
        %v1443 = vpop.f32.mrb[0].mxu0
        %1444 = vmatprep.mubr.bf16.mxu0 %v1256
        %1445 = vmatmul.mubr.bf16.gmra.mrb[0].mxu0 %v1255
        %v1446 = vpop.f32.mrb[0].mxu0
        %v1447 = vadd.f32 %v1306, %v1446
        %v1448 = vpop.f32.mrb[0].mxu0
        %v1449 = vpop.f32.mrb[0].mxu0
        %v1450 = vadd.f32 %v1306, %v1449
        %v1451 = vpop.f32.mrb[0].mxu0
        %1452 = vmatprep.mubr.bf16.mxu0 %v1258
        %1453 = vmatmul.mubr.bf16.gmra.mrb[0].mxu0 %v1257
        %v1454 = vpop.f32.mrb[0].mxu0
        %v1455 = vadd.f32 %v1306, %v1454
        %v1456 = vpop.f32.mrb[0].mxu0
        %v1457 = vpop.f32.mrb[0].mxu0
        %v1458 = vadd.f32 %v1306, %v1457
        %v1459 = vpop.f32.mrb[0].mxu0
        %1460 = vmatprep.mubr.bf16.mxu0 %v1260
        %1461 = vmatmul.mubr.bf16.gmra.mrb[0].mxu0 %v1259
        %v1462 = vpop.f32.mrb[0].mxu0
        %v1463 = vadd.f32 %v1306, %v1462
        %v1464 = vpop.f32.mrb[0].mxu0
        %v1465 = vpop.f32.mrb[0].mxu0
        %v1466 = vadd.f32 %v1306, %v1465
        %v1467 = vpop.f32.mrb[0].mxu0
        %1468 = vmatprep.mubr.bf16.mxu0 %v1262
        %1469 = vmatmul.mubr.bf16.gmra.mrb[0].mxu0 %v1261
        %v1470 = vpop.f32.mrb[0].mxu0
        %v1471 = vadd.f32 %v1306, %v1470
        %v1472 = vpop.f32.mrb[0].mxu0
        %v1473 = vpop.f32.mrb[0].mxu0
        %v1474 = vadd.f32 %v1306, %v1473
        %v1475 = vpop.f32.mrb[0].mxu0
        %1476 = vmatprep.mubr.bf16.mxu0 %v1264
        %1477 = vmatmul.mubr.bf16.gmra.mrb[0].mxu0 %v1263
        %v1478 = vpop.f32.mrb[0].mxu0
        %v1479 = vadd.f32 %v1306, %v1478
        %v1480 = vpop.f32.mrb[0].mxu0
        %v1481 = vpop.f32.mrb[0].mxu0
        %v1482 = vadd.f32 %v1306, %v1481
        %v1483 = vpop.f32.mrb[0].mxu0
        %1484 = vmatprep.mubr.bf16.mxu0 %v1266
        %1485 = vmatmul.mubr.bf16.gmra.mrb[0].mxu0 %v1265
        %v1486 = vpop.f32.mrb[0].mxu0
        %v1487 = vadd.f32 %v1306, %v1486
        %v1488 = vpop.f32.mrb[0].mxu0
        %v1489 = vpop.f32.mrb[0].mxu0
        %v1490 = vadd.f32 %v1306, %v1489
        %v1491 = vpop.f32.mrb[0].mxu0
        %1492 = vmatprep.mubr.bf16.mxu0 %v1268
        %1493 = vmatmul.mubr.bf16.gmra.mrb[0].mxu0 %v1267
        %v1494 = vpop.f32.mrb[0].mxu0
        %v1495 = vadd.f32 %v1306, %v1494
        %v1496 = vpop.f32.mrb[0].mxu0
        %v1497 = vpop.f32.mrb[0].mxu0
        %v1498 = vadd.f32 %v1306, %v1497
        %v1499 = vpop.f32.mrb[0].mxu0
        %1500 = vdwg.mxu0
        %v1501 = vmax.f32 %v1439, 0.0
        %v1502 = vmax.f32 %v1442, 0.0
        %v1503 = vmax.f32 %v1447, 0.0
        %v1504 = vmax.f32 %v1450, 0.0
        %v1505 = vmax.f32 %v1455, 0.0
        %v1506 = vmax.f32 %v1458, 0.0
        %v1507 = vmax.f32 %v1463, 0.0
        %v1508 = vmax.f32 %v1466, 0.0
        %v1509 = vmax.f32 %v1471, 0.0
        %v1510 = vmax.f32 %v1474, 0.0
        %v1511 = vmax.f32 %v1479, 0.0
        %v1512 = vmax.f32 %v1482, 0.0
        %v1513 = vmax.f32 %v1487, 0.0
        %v1514 = vmax.f32 %v1490, 0.0
        %v1515 = vmax.f32 %v1495, 0.0
        %v1516 = vmax.f32 %v1498, 0.0
        %v1517 = vpack.c.bf16 %v1502, %v1501
        %v1518 = vpack.c.bf16 %v1504, %v1503
        %v1519 = vpack.c.bf16 %v1506, %v1505
        %v1520 = vpack.c.bf16 %v1508, %v1507
        %v1521 = vpack.c.bf16 %v1510, %v1509
        %v1522 = vpack.c.bf16 %v1512, %v1511
        %v1523 = vpack.c.bf16 %v1514, %v1513
        %v1524 = vpack.c.bf16 %v1516, %v1515
        %v1525 = vld [vmem:[%s11] sm:$0xf]
        %v1526 = vld [vmem:[%s11 + $0x4] sm:$0xf]
        %v1527 = vld [vmem:[%s11 + $0x8] sm:$0xf]
        %v1528 = vld [vmem:[%s11 + $0xc] sm:$0xf]
        %v1529 = vld [vmem:[%s11 + $0x10] sm:$0xf]
        %v1530 = vld [vmem:[%s11 + $0x14] sm:$0xf]
        %v1531 = vld [vmem:[%s11 + $0x18] sm:$0xf]
        %v1532 = vld [vmem:[%s11 + $0x1c] sm:$0xf]
        %v1533 = vld [vmem:[%s11 + $0x20] sm:$0xf]
        %v1534 = vld [vmem:[%s11 + $0x24] sm:$0xf]
        %v1535 = vld [vmem:[%s11 + $0x28] sm:$0xf]
        %v1536 = vld [vmem:[%s11 + $0x2c] sm:$0xf]
        %v1537 = vld [vmem:[%s11 + $0x30] sm:$0xf]
        %v1538 = vld [vmem:[%s11 + $0x34] sm:$0xf]
        %v1539 = vld [vmem:[%s11 + $0x38] sm:$0xf]
        %v1540 = vld [vmem:[%s11 + $0x3c] sm:$0xf]
        %v1541 = vld [vmem:[#allocation13] sm:$0x1]
        %v1543 = vlaneseq
        %v1544 = vshrl.u32 %v1543, 7
        %v1545 = vsub.s32 0, %v1544
        %v1546 = vrot.slane %v1541, %v1545
        %v1564 = vunpack.c.l.b16 %v1525
        %v1565 = vunpack.c.l.b16 %v1526
        %v1566 = vunpack.c.l.b16 %v1527
        %v1567 = vunpack.c.l.b16 %v1528
        %v1568 = vunpack.c.l.b16 %v1529
        %v1569 = vunpack.c.l.b16 %v1530
        %v1570 = vunpack.c.l.b16 %v1531
        %v1571 = vunpack.c.l.b16 %v1532
        %v1572 = vunpack.c.l.b16 %v1533
        %v1573 = vunpack.c.l.b16 %v1534
        %v1574 = vunpack.c.l.b16 %v1535
        %v1575 = vunpack.c.l.b16 %v1536
        %v1576 = vunpack.c.l.b16 %v1537
        %v1577 = vunpack.c.l.b16 %v1538
        %v1578 = vunpack.c.l.b16 %v1539
        %v1579 = vunpack.c.l.b16 %v1540
        %v1580 = vpack.c.b16 %v1565, %v1564
        %v1581 = vpack.c.b16 %v1567, %v1566
        %v1582 = vpack.c.b16 %v1569, %v1568
        %v1583 = vpack.c.b16 %v1571, %v1570
        %v1584 = vpack.c.b16 %v1573, %v1572
        %v1585 = vpack.c.b16 %v1575, %v1574
        %v1586 = vpack.c.b16 %v1577, %v1576
        %v1587 = vpack.c.b16 %v1579, %v1578
        %1596 = vmatprep.subr.bf16.mxu0 0
        %1597 = vmatpush1.bf16.msra.mxu0 %v1580
        %1598 = vmatprep.subr.bf16.mxu0 0
        %1599 = vmatpush1.bf16.msra.mxu0 %v1581
        %1600 = vmatprep.subr.bf16.mxu0 0
        %1601 = vmatpush1.bf16.msra.mxu0 %v1582
        %1602 = vmatprep.subr.bf16.mxu0 0
        %1603 = vmatpush1.bf16.msra.mxu0 %v1583
        %1604 = vmatprep.subr.bf16.mxu0 0
        %1605 = vmatpush1.bf16.msra.mxu0 %v1584
        %1606 = vmatprep.subr.bf16.mxu0 0
        %1607 = vmatpush1.bf16.msra.mxu0 %v1585
        %1608 = vmatprep.subr.bf16.mxu0 0
        %1609 = vmatpush1.bf16.msra.mxu0 %v1586
        %1610 = vmatprep.subr.bf16.mxu0 0
        %1611 = vmatpush1.bf16.msra.mxu0 %v1587
        %1612 = vmatprep.subr.bf16.mxu0 0
        %1613 = vmatpush1.bf16.msra.mxu0 0
        %1614 = vmatprep.subr.bf16.mxu0 0
        %1615 = vmatpush1.bf16.msra.mxu0 0
        %1616 = vmatprep.subr.bf16.mxu0 0
        %1617 = vmatpush1.bf16.msra.mxu0 0
        %1618 = vmatprep.subr.bf16.mxu0 0
        %1619 = vmatpush1.bf16.msra.mxu0 0
        %1620 = vmatprep.subr.bf16.mxu0 0
        %1621 = vmatpush1.bf16.msra.mxu0 0
        %1622 = vmatprep.subr.bf16.mxu0 0
        %1623 = vmatpush1.bf16.msra.mxu0 0
        %1624 = vmatprep.subr.bf16.mxu0 0
        %1625 = vmatpush1.bf16.msra.mxu0 0
        %1626 = vmatprep.subr.bf16.mxu0 0
        %1627 = vmatpush1.bf16.msra.mxu0 0
        %1628 = vmatprep.mubr.bf16.mxu0 0
        %1629 = vmatmul.mubr.bf16.gmra.mrb[0].mxu0 %v1517
        %v1630 = vpop.f32.mrb[0].mxu0
        %v1631 = vadd.f32 %v1546, %v1630
        %v1632 = vpop.f32.mrb[0].mxu0
        %v1633 = vpop.f32.mrb[0].mxu0
        %v1634 = vadd.f32 %v1546, %v1633
        %v1635 = vpop.f32.mrb[0].mxu0
        %1636 = vmatprep.mubr.bf16.mxu0 0
        %1637 = vmatmul.mubr.bf16.gmra.mrb[0].mxu0 %v1518
        %v1638 = vpop.f32.mrb[0].mxu0
        %v1639 = vadd.f32 %v1546, %v1638
        %v1640 = vpop.f32.mrb[0].mxu0
        %v1641 = vpop.f32.mrb[0].mxu0
        %v1642 = vadd.f32 %v1546, %v1641
        %v1643 = vpop.f32.mrb[0].mxu0
        %1644 = vmatprep.mubr.bf16.mxu0 0
        %1645 = vmatmul.mubr.bf16.gmra.mrb[0].mxu0 %v1519
        %v1646 = vpop.f32.mrb[0].mxu0
        %v1647 = vadd.f32 %v1546, %v1646
        %v1648 = vpop.f32.mrb[0].mxu0
        %v1649 = vpop.f32.mrb[0].mxu0
        %v1650 = vadd.f32 %v1546, %v1649
        %v1651 = vpop.f32.mrb[0].mxu0
        %1652 = vmatprep.mubr.bf16.mxu0 0
        %1653 = vmatmul.mubr.bf16.gmra.mrb[0].mxu0 %v1520
        %v1654 = vpop.f32.mrb[0].mxu0
        %v1655 = vadd.f32 %v1546, %v1654
        %v1656 = vpop.f32.mrb[0].mxu0
        %v1657 = vpop.f32.mrb[0].mxu0
        %v1658 = vadd.f32 %v1546, %v1657
        %v1659 = vpop.f32.mrb[0].mxu0
        %1660 = vmatprep.mubr.bf16.mxu0 0
        %1661 = vmatmul.mubr.bf16.gmra.mrb[0].mxu0 %v1521
        %v1662 = vpop.f32.mrb[0].mxu0
        %v1663 = vadd.f32 %v1546, %v1662
        %v1664 = vpop.f32.mrb[0].mxu0
        %v1665 = vpop.f32.mrb[0].mxu0
        %v1666 = vadd.f32 %v1546, %v1665
        %v1667 = vpop.f32.mrb[0].mxu0
        %1668 = vmatprep.mubr.bf16.mxu0 0
        %1669 = vmatmul.mubr.bf16.gmra.mrb[0].mxu0 %v1522
        %v1670 = vpop.f32.mrb[0].mxu0
        %v1671 = vadd.f32 %v1546, %v1670
        %v1672 = vpop.f32.mrb[0].mxu0
        %v1673 = vpop.f32.mrb[0].mxu0
        %v1674 = vadd.f32 %v1546, %v1673
        %v1675 = vpop.f32.mrb[0].mxu0
        %1676 = vmatprep.mubr.bf16.mxu0 0
        %1677 = vmatmul.mubr.bf16.gmra.mrb[0].mxu0 %v1523
        %v1678 = vpop.f32.mrb[0].mxu0
        %v1679 = vadd.f32 %v1546, %v1678
        %v1680 = vpop.f32.mrb[0].mxu0
        %v1681 = vpop.f32.mrb[0].mxu0
        %v1682 = vadd.f32 %v1546, %v1681
        %v1683 = vpop.f32.mrb[0].mxu0
        %1684 = vmatprep.mubr.bf16.mxu0 0
        %1685 = vmatmul.mubr.bf16.gmra.mrb[0].mxu0 %v1524
        %v1686 = vpop.f32.mrb[0].mxu0
        %v1687 = vadd.f32 %v1546, %v1686
        %v1688 = vpop.f32.mrb[0].mxu0
        %v1689 = vpop.f32.mrb[0].mxu0
        %v1690 = vadd.f32 %v1546, %v1689
        %v1691 = vpop.f32.mrb[0].mxu0
        %1692 = vdwg.mxu0
        %v1693 = vpack.c.bf16 %v1634, %v1631
        %v1694 = vpack.c.bf16 %v1642, %v1639
        %v1695 = vpack.c.bf16 %v1650, %v1647
        %v1696 = vpack.c.bf16 %v1658, %v1655
        %v1697 = vpack.c.bf16 %v1666, %v1663
        %v1698 = vpack.c.bf16 %v1674, %v1671
        %v1699 = vpack.c.bf16 %v1682, %v1679
        %v1700 = vpack.c.bf16 %v1690, %v1687
        %v1701 = vld [vmem:[%s14] sm:$0xff]
        %v1702 = vld [vmem:[%s14 + $0x8] sm:$0xff]
        %v1703 = vld [vmem:[%s14 + $0x10] sm:$0xff]
        %v1704 = vld [vmem:[%s14 + $0x18] sm:$0xff]
        %v1705 = vld [vmem:[%s15] sm:$0x3]
        %v1707 = vlaneseq
        %v1708 = vshrl.u32 %v1707, 7
        %v1709 = vsub.s32 0, %v1708
        %v1710 = vrot.slane %v1705, %v1709
        %v1711 = vlaneseq
        %v1712 = vshrl.u32 %v1711, 7
        %v1713 = vsub.s32 1, %v1712
        %v1714 = vrot.slane %v1705, %v1713
        %v1721 = vunpack.c.l.b16 %v1701
        %v1722 = vunpack.c.h.b16 %v1701
        %v1723 = vunpack.c.l.b16 %v1702
        %v1724 = vunpack.c.h.b16 %v1702
        %v1725 = vunpack.c.l.b16 %v1703
        %v1726 = vunpack.c.h.b16 %v1703
        %v1727 = vunpack.c.l.b16 %v1704
        %v1728 = vunpack.c.h.b16 %v1704
        %v1729 = vpack.c.b16 %v1723, %v1721
        %v1730 = vpack.c.b16 %v1724, %v1722
        %v1731 = vpack.c.b16 %v1727, %v1725
        %v1732 = vpack.c.b16 %v1728, %v1726
        %1737 = vmatprep.subr.bf16.mxu0 %v1730
        %1738 = vmatpush1.bf16.msra.mxu0 %v1729
        %1739 = vmatprep.subr.bf16.mxu0 %v1732
        %1740 = vmatpush1.bf16.msra.mxu0 %v1731
        %1741 = vmatprep.subr.bf16.mxu0 0
        %1742 = vmatpush1.bf16.msra.mxu0 0
        %1743 = vmatprep.subr.bf16.mxu0 0
        %1744 = vmatpush1.bf16.msra.mxu0 0
        %1745 = vmatprep.subr.bf16.mxu0 0
        %1746 = vmatpush1.bf16.msra.mxu0 0
        %1747 = vmatprep.subr.bf16.mxu0 0
        %1748 = vmatpush1.bf16.msra.mxu0 0
        %1749 = vmatprep.subr.bf16.mxu0 0
        %1750 = vmatpush1.bf16.msra.mxu0 0
        %1751 = vmatprep.subr.bf16.mxu0 0
        %1752 = vmatpush1.bf16.msra.mxu0 0
        %1753 = vmatprep.subr.bf16.mxu0 0
        %1754 = vmatpush1.bf16.msra.mxu0 0
        %1755 = vmatprep.subr.bf16.mxu0 0
        %1756 = vmatpush1.bf16.msra.mxu0 0
        %1757 = vmatprep.subr.bf16.mxu0 0
        %1758 = vmatpush1.bf16.msra.mxu0 0
        %1759 = vmatprep.subr.bf16.mxu0 0
        %1760 = vmatpush1.bf16.msra.mxu0 0
        %1761 = vmatprep.subr.bf16.mxu0 0
        %1762 = vmatpush1.bf16.msra.mxu0 0
        %1763 = vmatprep.subr.bf16.mxu0 0
        %1764 = vmatpush1.bf16.msra.mxu0 0
        %1765 = vmatprep.subr.bf16.mxu0 0
        %1766 = vmatpush1.bf16.msra.mxu0 0
        %1767 = vmatprep.subr.bf16.mxu0 0
        %1768 = vmatpush1.bf16.msra.mxu0 0
        %1769 = vmatprep.mubr.bf16.mxu0 0
        %1770 = vmatmul.mubr.bf16.gmra.mrb[0].mxu0 %v1014
        %v1771 = vpop.f32.mrb[0].mxu0
        %v1772 = vadd.f32 %v1710, %v1771
        %v1773 = vpop.f32.mrb[0].mxu0
        %v1774 = vadd.f32 %v1714, %v1773
        %v1775 = vpop.f32.mrb[0].mxu0
        %v1776 = vpop.f32.mrb[0].mxu0
        %1777 = vdwg.mxu0
        %v1778 = vld [vmem:[%s13] sm:$0xf]
        %v1781 = vunpack.c.l.s4 1983009808
        %v1782 = vunpack.c.0.s8 %v1781
        %v1783 = vlaneseq
        %v1784 = vshrl.u32 %v1783, 7
        %v1785 = vsub.s32 %v1782, %v1784
        %v1786 = vrot.slane %v1778, %v1785
        %v1787 = vcombine.high %v1786, %v1786
        %v1789 = vsel %vm777, %v1693, 0
        %v1792 = vsel %vm777, %v1694, 0
        %v1795 = vsel %vm777, %v1695, 0
        %v1798 = vsel %vm777, %v1696, 0
        %v1801 = vsel %vm777, %v1697, 0
        %v1804 = vsel %vm777, %v1698, 0
        %v1807 = vsel %vm777, %v1699, 0
        %v1810 = vsel %vm777, %v1700, 0
        %v1813 = vand.u32 %v1786, %v784
        %v1816 = vand.u32 %v1787, %v784
        %1818 = vmatprep.subr.bf16.mxu0 %v1816
        %1819 = vmatpush1.bf16.msra.mxu0 %v1813
        %1820 = vmatprep.subr.bf16.mxu0 0
        %1821 = vmatpush1.bf16.msra.mxu0 0
        %1822 = vmatprep.subr.bf16.mxu0 0
        %1823 = vmatpush1.bf16.msra.mxu0 0
        %1824 = vmatprep.subr.bf16.mxu0 0
        %1825 = vmatpush1.bf16.msra.mxu0 0
        %1826 = vmatprep.subr.bf16.mxu0 0
        %1827 = vmatpush1.bf16.msra.mxu0 0
        %1828 = vmatprep.subr.bf16.mxu0 0
        %1829 = vmatpush1.bf16.msra.mxu0 0
        %1830 = vmatprep.subr.bf16.mxu0 0
        %1831 = vmatpush1.bf16.msra.mxu0 0
        %1832 = vmatprep.subr.bf16.mxu0 0
        %1833 = vmatpush1.bf16.msra.mxu0 0
        %1834 = vmatprep.subr.bf16.mxu0 0
        %1835 = vmatpush1.bf16.msra.mxu0 0
        %1836 = vmatprep.subr.bf16.mxu0 0
        %1837 = vmatpush1.bf16.msra.mxu0 0
        %1838 = vmatprep.subr.bf16.mxu0 0
        %1839 = vmatpush1.bf16.msra.mxu0 0
        %1840 = vmatprep.subr.bf16.mxu0 0
        %1841 = vmatpush1.bf16.msra.mxu0 0
        %1842 = vmatprep.subr.bf16.mxu0 0
        %1843 = vmatpush1.bf16.msra.mxu0 0
        %1844 = vmatprep.subr.bf16.mxu0 0
        %1845 = vmatpush1.bf16.msra.mxu0 0
        %1846 = vmatprep.subr.bf16.mxu0 0
        %1847 = vmatpush1.bf16.msra.mxu0 0
        %1848 = vmatprep.subr.bf16.mxu0 0
        %1849 = vmatpush1.bf16.msra.mxu0 0
        %1850 = vmatprep.mubr.bf16.mxu0 0
        %1851 = vmatmul.mubr.bf16.gmra.mrb[0].mxu0 %v1789
        %v1852 = vpop.f32.mrb[0].mxu0
        %v1853 = vadd.f32 0.0, %v1852
        %v1854 = vpop.f32.mrb[0].mxu0
        %v1855 = vadd.f32 0.0, %v1854
        %v1856 = vpop.f32.mrb[0].mxu0
        %v1857 = vadd.f32 0.0, %v1856
        %v1858 = vpop.f32.mrb[0].mxu0
        %v1859 = vadd.f32 0.0, %v1858
        %1860 = vmatprep.mubr.bf16.mxu0 0
        %1861 = vmatmul.mubr.bf16.gmra.mrb[0].mxu0 %v1792
        %v1862 = vpop.f32.mrb[0].mxu0
        %v1863 = vadd.f32 0.0, %v1862
        %v1864 = vpop.f32.mrb[0].mxu0
        %v1865 = vadd.f32 0.0, %v1864
        %v1866 = vpop.f32.mrb[0].mxu0
        %v1867 = vadd.f32 0.0, %v1866
        %v1868 = vpop.f32.mrb[0].mxu0
        %v1869 = vadd.f32 0.0, %v1868
        %1870 = vmatprep.mubr.bf16.mxu0 0
        %1871 = vmatmul.mubr.bf16.gmra.mrb[0].mxu0 %v1795
        %v1872 = vpop.f32.mrb[0].mxu0
        %v1873 = vadd.f32 0.0, %v1872
        %v1874 = vpop.f32.mrb[0].mxu0
        %v1875 = vadd.f32 0.0, %v1874
        %v1876 = vpop.f32.mrb[0].mxu0
        %v1877 = vadd.f32 0.0, %v1876
        %v1878 = vpop.f32.mrb[0].mxu0
        %v1879 = vadd.f32 0.0, %v1878
        %1880 = vmatprep.mubr.bf16.mxu0 0
        %1881 = vmatmul.mubr.bf16.gmra.mrb[0].mxu0 %v1798
        %v1882 = vpop.f32.mrb[0].mxu0
        %v1883 = vadd.f32 0.0, %v1882
        %v1884 = vpop.f32.mrb[0].mxu0
        %v1885 = vadd.f32 0.0, %v1884
        %v1886 = vpop.f32.mrb[0].mxu0
        %v1887 = vadd.f32 0.0, %v1886
        %v1888 = vpop.f32.mrb[0].mxu0
        %v1889 = vadd.f32 0.0, %v1888
        %1890 = vmatprep.mubr.bf16.mxu0 0
        %1891 = vmatmul.mubr.bf16.gmra.mrb[0].mxu0 %v1801
        %v1892 = vpop.f32.mrb[0].mxu0
        %v1893 = vadd.f32 0.0, %v1892
        %v1894 = vpop.f32.mrb[0].mxu0
        %v1895 = vadd.f32 0.0, %v1894
        %v1896 = vpop.f32.mrb[0].mxu0
        %v1897 = vadd.f32 0.0, %v1896
        %v1898 = vpop.f32.mrb[0].mxu0
        %v1899 = vadd.f32 0.0, %v1898
        %1900 = vmatprep.mubr.bf16.mxu0 0
        %1901 = vmatmul.mubr.bf16.gmra.mrb[0].mxu0 %v1804
        %v1902 = vpop.f32.mrb[0].mxu0
        %v1903 = vadd.f32 0.0, %v1902
        %v1904 = vpop.f32.mrb[0].mxu0
        %v1905 = vadd.f32 0.0, %v1904
        %v1906 = vpop.f32.mrb[0].mxu0
        %v1907 = vadd.f32 0.0, %v1906
        %v1908 = vpop.f32.mrb[0].mxu0
        %v1909 = vadd.f32 0.0, %v1908
        %1910 = vmatprep.mubr.bf16.mxu0 0
        %1911 = vmatmul.mubr.bf16.gmra.mrb[0].mxu0 %v1807
        %v1912 = vpop.f32.mrb[0].mxu0
        %v1913 = vadd.f32 0.0, %v1912
        %v1914 = vpop.f32.mrb[0].mxu0
        %v1915 = vadd.f32 0.0, %v1914
        %v1916 = vpop.f32.mrb[0].mxu0
        %v1917 = vadd.f32 0.0, %v1916
        %v1918 = vpop.f32.mrb[0].mxu0
        %v1919 = vadd.f32 0.0, %v1918
        %1920 = vmatprep.mubr.bf16.mxu0 0
        %1921 = vmatmul.mubr.bf16.gmra.mrb[0].mxu0 %v1810
        %v1922 = vpop.f32.mrb[0].mxu0
        %v1923 = vadd.f32 0.0, %v1922
        %v1924 = vpop.f32.mrb[0].mxu0
        %v1925 = vadd.f32 0.0, %v1924
        %v1926 = vpop.f32.mrb[0].mxu0
        %v1927 = vadd.f32 0.0, %v1926
        %v1928 = vpop.f32.mrb[0].mxu0
        %v1929 = vadd.f32 0.0, %v1928
        %1930 = vdwg.mxu0
        %v1933 = vcombine.low %v1772, %v1774
        %v1934 = vcombine.high %v1772, %v1774
        %v1936 = vunpack.c.l.s4 1966171168
        %v1937 = vunpack.c.0.s8 %v1936
        %v1938 = vlaneseq
        %v1939 = vshrl.u32 %v1938, 7
        %v1940 = vsub.s32 %v1937, %v1939
        %v1941 = vrot.slane %v1933, %v1940
        %v1943 = vunpack.c.l.s4 1966171168
        %v1944 = vunpack.c.0.s8 %v1943
        %v1945 = vlaneseq
        %v1946 = vshrl.u32 %v1945, 7
        %v1947 = vsub.s32 %v1944, %v1946
        %v1948 = vrot.slane %v1934, %v1947
        %v1949 = vcombine.high %v1941, %v1941
        %v1950 = vcombine.high %v1948, %v1948
        %v1952 = vunpack.c.l.s4 1966171168
        %v1953 = vunpack.c.0.s8 %v1952
        %v1954 = vlaneseq
        %v1955 = vshrl.u32 %v1954, 7
        %v1956 = vsub.s32 %v1953, %v1955
        %v1957 = vrot.slane %v1941, %v1956
        %v1959 = vunpack.c.l.s4 1966171168
        %v1960 = vunpack.c.0.s8 %v1959
        %v1961 = vlaneseq
        %v1962 = vshrl.u32 %v1961, 7
        %v1963 = vsub.s32 %v1960, %v1962
        %v1964 = vrot.slane %v1948, %v1963
        %v1966 = vunpack.c.l.s4 1966171168
        %v1967 = vunpack.c.0.s8 %v1966
        %v1968 = vlaneseq
        %v1969 = vshrl.u32 %v1968, 7
        %v1970 = vsub.s32 %v1967, %v1969
        %v1971 = vrot.slane %v1949, %v1970
        %v1973 = vunpack.c.l.s4 1966171168
        %v1974 = vunpack.c.0.s8 %v1973
        %v1975 = vlaneseq
        %v1976 = vshrl.u32 %v1975, 7
        %v1977 = vsub.s32 %v1974, %v1976
        %v1978 = vrot.slane %v1950, %v1977
        %v1979 = vcombine.high %v1957, %v1957
        %v1980 = vcombine.high %v1964, %v1964
        %v1981 = vcombine.high %v1971, %v1971
        %v1982 = vcombine.high %v1978, %v1978
        %v1983 = vlaneseq
        %v1984 = vshrl.u32 %v1983, 7
        %v1985 = vsub.s32 0, %v1984
        %v1986 = vrot.slane %v1957, %v1985
        %v1987 = vlaneseq
        %v1988 = vshrl.u32 %v1987, 7
        %v1989 = vsub.s32 1, %v1988
        %v1990 = vrot.slane %v1957, %v1989
        %v1991 = vlaneseq
        %v1992 = vshrl.u32 %v1991, 7
        %v1993 = vsub.s32 0, %v1992
        %v1994 = vrot.slane %v1971, %v1993
        %v1995 = vlaneseq
        %v1996 = vshrl.u32 %v1995, 7
        %v1997 = vsub.s32 1, %v1996
        %v1998 = vrot.slane %v1971, %v1997
        %v1999 = vlaneseq
        %v2000 = vshrl.u32 %v1999, 7
        %v2001 = vsub.s32 0, %v2000
        %v2002 = vrot.slane %v1979, %v2001
        %v2003 = vlaneseq
        %v2004 = vshrl.u32 %v2003, 7
        %v2005 = vsub.s32 1, %v2004
        %v2006 = vrot.slane %v1979, %v2005
        %v2007 = vlaneseq
        %v2008 = vshrl.u32 %v2007, 7
        %v2009 = vsub.s32 0, %v2008
        %v2010 = vrot.slane %v1981, %v2009
        %v2011 = vlaneseq
        %v2012 = vshrl.u32 %v2011, 7
        %v2013 = vsub.s32 1, %v2012
        %v2014 = vrot.slane %v1981, %v2013
        %v2015 = vlaneseq
        %v2016 = vshrl.u32 %v2015, 7
        %v2017 = vsub.s32 0, %v2016
        %v2018 = vrot.slane %v1964, %v2017
        %v2019 = vlaneseq
        %v2020 = vshrl.u32 %v2019, 7
        %v2021 = vsub.s32 1, %v2020
        %v2022 = vrot.slane %v1964, %v2021
        %v2023 = vlaneseq
        %v2024 = vshrl.u32 %v2023, 7
        %v2025 = vsub.s32 0, %v2024
        %v2026 = vrot.slane %v1978, %v2025
        %v2027 = vlaneseq
        %v2028 = vshrl.u32 %v2027, 7
        %v2029 = vsub.s32 1, %v2028
        %v2030 = vrot.slane %v1978, %v2029
        %v2031 = vlaneseq
        %v2032 = vshrl.u32 %v2031, 7
        %v2033 = vsub.s32 0, %v2032
        %v2034 = vrot.slane %v1980, %v2033
        %v2035 = vlaneseq
        %v2036 = vshrl.u32 %v2035, 7
        %v2037 = vsub.s32 1, %v2036
        %v2038 = vrot.slane %v1980, %v2037
        %v2039 = vlaneseq
        %v2040 = vshrl.u32 %v2039, 7
        %v2041 = vsub.s32 0, %v2040
        %v2042 = vrot.slane %v1982, %v2041
        %v2043 = vlaneseq
        %v2044 = vshrl.u32 %v2043, 7
        %v2045 = vsub.s32 1, %v2044
        %v2046 = vrot.slane %v1982, %v2045
        %v2063 = vadd.f32 %v1853, %v1986
        %v2064 = vadd.f32 %v1855, %v1990
        %v2065 = vadd.f32 %v1857, %v1986
        %v2066 = vadd.f32 %v1859, %v1990
        %v2067 = vadd.f32 %v1863, %v1994
        %v2068 = vadd.f32 %v1865, %v1998
        %v2069 = vadd.f32 %v1867, %v1994
        %v2070 = vadd.f32 %v1869, %v1998
        %v2071 = vadd.f32 %v1873, %v2002
        %v2072 = vadd.f32 %v1875, %v2006
        %v2073 = vadd.f32 %v1877, %v2002
        %v2074 = vadd.f32 %v1879, %v2006
        %v2075 = vadd.f32 %v1883, %v2010
        %v2076 = vadd.f32 %v1885, %v2014
        %v2077 = vadd.f32 %v1887, %v2010
        %v2078 = vadd.f32 %v1889, %v2014
        %v2079 = vadd.f32 %v1893, %v2018
        %v2080 = vadd.f32 %v1895, %v2022
        %v2081 = vadd.f32 %v1897, %v2018
        %v2082 = vadd.f32 %v1899, %v2022
        %v2083 = vadd.f32 %v1903, %v2026
        %v2084 = vadd.f32 %v1905, %v2030
        %v2085 = vadd.f32 %v1907, %v2026
        %v2086 = vadd.f32 %v1909, %v2030
        %v2087 = vadd.f32 %v1913, %v2034
        %v2088 = vadd.f32 %v1915, %v2038
        %v2089 = vadd.f32 %v1917, %v2034
        %v2090 = vadd.f32 %v1919, %v2038
        %v2091 = vadd.f32 %v1923, %v2042
        %v2092 = vadd.f32 %v1925, %v2046
        %v2093 = vadd.f32 %v1927, %v2042
        %v2094 = vadd.f32 %v1929, %v2046
        %v2095 = vmax.f32 %v2063, 0.0
        %v2096 = vmax.f32 %v2064, 0.0
        %v2097 = vmax.f32 %v2065, 0.0
        %v2098 = vmax.f32 %v2066, 0.0
        %v2099 = vmax.f32 %v2067, 0.0
        %v2100 = vmax.f32 %v2068, 0.0
        %v2101 = vmax.f32 %v2069, 0.0
        %v2102 = vmax.f32 %v2070, 0.0
        %v2103 = vmax.f32 %v2071, 0.0
        %v2104 = vmax.f32 %v2072, 0.0
        %v2105 = vmax.f32 %v2073, 0.0
        %v2106 = vmax.f32 %v2074, 0.0
        %v2107 = vmax.f32 %v2075, 0.0
        %v2108 = vmax.f32 %v2076, 0.0
        %v2109 = vmax.f32 %v2077, 0.0
        %v2110 = vmax.f32 %v2078, 0.0
        %v2111 = vmax.f32 %v2079, 0.0
        %v2112 = vmax.f32 %v2080, 0.0
        %v2113 = vmax.f32 %v2081, 0.0
        %v2114 = vmax.f32 %v2082, 0.0
        %v2115 = vmax.f32 %v2083, 0.0
        %v2116 = vmax.f32 %v2084, 0.0
        %v2117 = vmax.f32 %v2085, 0.0
        %v2118 = vmax.f32 %v2086, 0.0
        %v2119 = vmax.f32 %v2087, 0.0
        %v2120 = vmax.f32 %v2088, 0.0
        %v2121 = vmax.f32 %v2089, 0.0
        %v2122 = vmax.f32 %v2090, 0.0
        %v2123 = vmax.f32 %v2091, 0.0
        %v2124 = vmax.f32 %v2092, 0.0
        %v2125 = vmax.f32 %v2093, 0.0
        %v2126 = vmax.f32 %v2094, 0.0
        %v2127 = vpack.c.bf16 %v2097, %v2095
        %v2128 = vpack.c.bf16 %v2098, %v2096
        %v2129 = vpack.c.bf16 %v2101, %v2099
        %v2130 = vpack.c.bf16 %v2102, %v2100
        %v2131 = vpack.c.bf16 %v2105, %v2103
        %v2132 = vpack.c.bf16 %v2106, %v2104
        %v2133 = vpack.c.bf16 %v2109, %v2107
        %v2134 = vpack.c.bf16 %v2110, %v2108
        %v2135 = vpack.c.bf16 %v2113, %v2111
        %v2136 = vpack.c.bf16 %v2114, %v2112
        %v2137 = vpack.c.bf16 %v2117, %v2115
        %v2138 = vpack.c.bf16 %v2118, %v2116
        %v2139 = vpack.c.bf16 %v2121, %v2119
        %v2140 = vpack.c.bf16 %v2122, %v2120
        %v2141 = vpack.c.bf16 %v2125, %v2123
        %v2142 = vpack.c.bf16 %v2126, %v2124
        %v2143 = vld [vmem:[#allocation15] sm:$0xf]
        %v2144 = vld [vmem:[#allocation15 + $0x4] sm:$0xf]
        %v2145 = vld [vmem:[#allocation15 + $0x8] sm:$0xf]
        %v2146 = vld [vmem:[#allocation15 + $0xc] sm:$0xf]
        %v2147 = vld [vmem:[#allocation15 + $0x10] sm:$0xf]
        %v2148 = vld [vmem:[#allocation15 + $0x14] sm:$0xf]
        %v2149 = vld [vmem:[#allocation15 + $0x18] sm:$0xf]
        %v2150 = vld [vmem:[#allocation15 + $0x1c] sm:$0xf]
        %v2151 = vld [vmem:[#allocation15 + $0x20] sm:$0xf]
        %v2152 = vld [vmem:[#allocation15 + $0x24] sm:$0xf]
        %v2153 = vld [vmem:[#allocation15 + $0x28] sm:$0xf]
        %v2154 = vld [vmem:[#allocation15 + $0x2c] sm:$0xf]
        %v2155 = vld [vmem:[#allocation15 + $0x30] sm:$0xf]
        %v2156 = vld [vmem:[#allocation15 + $0x34] sm:$0xf]
        %v2157 = vld [vmem:[#allocation15 + $0x38] sm:$0xf]
        %v2158 = vld [vmem:[#allocation15 + $0x3c] sm:$0xf]
        %v2159 = vld [vmem:[#allocation15 + $0x40] sm:$0xf]
        %v2160 = vld [vmem:[#allocation15 + $0x44] sm:$0xf]
        %v2161 = vld [vmem:[#allocation15 + $0x48] sm:$0xf]
        %v2162 = vld [vmem:[#allocation15 + $0x4c] sm:$0xf]
        %v2163 = vld [vmem:[#allocation15 + $0x50] sm:$0xf]
        %v2164 = vld [vmem:[#allocation15 + $0x54] sm:$0xf]
        %v2165 = vld [vmem:[#allocation15 + $0x58] sm:$0xf]
        %v2166 = vld [vmem:[#allocation15 + $0x5c] sm:$0xf]
        %v2167 = vld [vmem:[#allocation15 + $0x60] sm:$0xf]
        %v2168 = vld [vmem:[#allocation15 + $0x64] sm:$0xf]
        %v2169 = vld [vmem:[#allocation15 + $0x68] sm:$0xf]
        %v2170 = vld [vmem:[#allocation15 + $0x6c] sm:$0xf]
        %v2171 = vld [vmem:[#allocation15 + $0x70] sm:$0xf]
        %v2172 = vld [vmem:[#allocation15 + $0x74] sm:$0xf]
        %v2173 = vld [vmem:[#allocation15 + $0x78] sm:$0xf]
        %v2174 = vld [vmem:[#allocation15 + $0x7c] sm:$0xf]
        %v2175 = vld [vmem:[%s17] sm:$0x1]
        %v2177 = vlaneseq
        %v2178 = vshrl.u32 %v2177, 7
        %v2179 = vsub.s32 0, %v2178
        %v2180 = vrot.slane %v2175, %v2179
        %v2214 = vunpack.c.l.b16 %v2143
        %v2215 = vunpack.c.l.b16 %v2144
        %v2216 = vunpack.c.l.b16 %v2145
        %v2217 = vunpack.c.l.b16 %v2146
        %v2218 = vunpack.c.l.b16 %v2147
        %v2219 = vunpack.c.l.b16 %v2148
        %v2220 = vunpack.c.l.b16 %v2149
        %v2221 = vunpack.c.l.b16 %v2150
        %v2222 = vunpack.c.l.b16 %v2151
        %v2223 = vunpack.c.l.b16 %v2152
        %v2224 = vunpack.c.l.b16 %v2153
        %v2225 = vunpack.c.l.b16 %v2154
        %v2226 = vunpack.c.l.b16 %v2155
        %v2227 = vunpack.c.l.b16 %v2156
        %v2228 = vunpack.c.l.b16 %v2157
        %v2229 = vunpack.c.l.b16 %v2158
        %v2230 = vunpack.c.l.b16 %v2159
        %v2231 = vunpack.c.l.b16 %v2160
        %v2232 = vunpack.c.l.b16 %v2161
        %v2233 = vunpack.c.l.b16 %v2162
        %v2234 = vunpack.c.l.b16 %v2163
        %v2235 = vunpack.c.l.b16 %v2164
        %v2236 = vunpack.c.l.b16 %v2165
        %v2237 = vunpack.c.l.b16 %v2166
        %v2238 = vunpack.c.l.b16 %v2167
        %v2239 = vunpack.c.l.b16 %v2168
        %v2240 = vunpack.c.l.b16 %v2169
        %v2241 = vunpack.c.l.b16 %v2170
        %v2242 = vunpack.c.l.b16 %v2171
        %v2243 = vunpack.c.l.b16 %v2172
        %v2244 = vunpack.c.l.b16 %v2173
        %v2245 = vunpack.c.l.b16 %v2174
        %v2246 = vpack.c.b16 %v2215, %v2214
        %v2247 = vpack.c.b16 %v2217, %v2216
        %v2248 = vpack.c.b16 %v2219, %v2218
        %v2249 = vpack.c.b16 %v2221, %v2220
        %v2250 = vpack.c.b16 %v2223, %v2222
        %v2251 = vpack.c.b16 %v2225, %v2224
        %v2252 = vpack.c.b16 %v2227, %v2226
        %v2253 = vpack.c.b16 %v2229, %v2228
        %v2254 = vpack.c.b16 %v2231, %v2230
        %v2255 = vpack.c.b16 %v2233, %v2232
        %v2256 = vpack.c.b16 %v2235, %v2234
        %v2257 = vpack.c.b16 %v2237, %v2236
        %v2258 = vpack.c.b16 %v2239, %v2238
        %v2259 = vpack.c.b16 %v2241, %v2240
        %v2260 = vpack.c.b16 %v2243, %v2242
        %v2261 = vpack.c.b16 %v2245, %v2244
        %2278 = vmatprep.subr.bf16.mxu0 0
        %2279 = vmatpush1.bf16.msra.mxu0 %v2246
        %2280 = vmatprep.subr.bf16.mxu0 0
        %2281 = vmatpush1.bf16.msra.mxu0 %v2247
        %2282 = vmatprep.subr.bf16.mxu0 0
        %2283 = vmatpush1.bf16.msra.mxu0 %v2248
        %2284 = vmatprep.subr.bf16.mxu0 0
        %2285 = vmatpush1.bf16.msra.mxu0 %v2249
        %2286 = vmatprep.subr.bf16.mxu0 0
        %2287 = vmatpush1.bf16.msra.mxu0 %v2250
        %2288 = vmatprep.subr.bf16.mxu0 0
        %2289 = vmatpush1.bf16.msra.mxu0 %v2251
        %2290 = vmatprep.subr.bf16.mxu0 0
        %2291 = vmatpush1.bf16.msra.mxu0 %v2252
        %2292 = vmatprep.subr.bf16.mxu0 0
        %2293 = vmatpush1.bf16.msra.mxu0 %v2253
        %2294 = vmatprep.subr.bf16.mxu0 0
        %2295 = vmatpush1.bf16.msra.mxu0 %v2254
        %2296 = vmatprep.subr.bf16.mxu0 0
        %2297 = vmatpush1.bf16.msra.mxu0 %v2255
        %2298 = vmatprep.subr.bf16.mxu0 0
        %2299 = vmatpush1.bf16.msra.mxu0 %v2256
        %2300 = vmatprep.subr.bf16.mxu0 0
        %2301 = vmatpush1.bf16.msra.mxu0 %v2257
        %2302 = vmatprep.subr.bf16.mxu0 0
        %2303 = vmatpush1.bf16.msra.mxu0 %v2258
        %2304 = vmatprep.subr.bf16.mxu0 0
        %2305 = vmatpush1.bf16.msra.mxu0 %v2259
        %2306 = vmatprep.subr.bf16.mxu0 0
        %2307 = vmatpush1.bf16.msra.mxu0 %v2260
        %2308 = vmatprep.subr.bf16.mxu0 0
        %2309 = vmatpush1.bf16.msra.mxu0 %v2261
        %2310 = vmatprep.mubr.bf16.mxu0 %v2128
        %2311 = vmatmul.mubr.bf16.gmra.mrb[0].mxu0 %v2127
        %v2312 = vpop.f32.mrb[0].mxu0
        %v2313 = vadd.f32 %v2180, %v2312
        %v2314 = vpop.f32.mrb[0].mxu0
        %v2315 = vpop.f32.mrb[0].mxu0
        %v2316 = vadd.f32 %v2180, %v2315
        %v2317 = vpop.f32.mrb[0].mxu0
        %2318 = vmatprep.mubr.bf16.mxu0 %v2130
        %2319 = vmatmul.mubr.bf16.gmra.mrb[0].mxu0 %v2129
        %v2320 = vpop.f32.mrb[0].mxu0
        %v2321 = vadd.f32 %v2180, %v2320
        %v2322 = vpop.f32.mrb[0].mxu0
        %v2323 = vpop.f32.mrb[0].mxu0
        %v2324 = vadd.f32 %v2180, %v2323
        %v2325 = vpop.f32.mrb[0].mxu0
        %2326 = vmatprep.mubr.bf16.mxu0 %v2132
        %2327 = vmatmul.mubr.bf16.gmra.mrb[0].mxu0 %v2131
        %v2328 = vpop.f32.mrb[0].mxu0
        %v2329 = vadd.f32 %v2180, %v2328
        %v2330 = vpop.f32.mrb[0].mxu0
        %v2331 = vpop.f32.mrb[0].mxu0
        %v2332 = vadd.f32 %v2180, %v2331
        %v2333 = vpop.f32.mrb[0].mxu0
        %2334 = vmatprep.mubr.bf16.mxu0 %v2134
        %2335 = vmatmul.mubr.bf16.gmra.mrb[0].mxu0 %v2133
        %v2336 = vpop.f32.mrb[0].mxu0
        %v2337 = vadd.f32 %v2180, %v2336
        %v2338 = vpop.f32.mrb[0].mxu0
        %v2339 = vpop.f32.mrb[0].mxu0
        %v2340 = vadd.f32 %v2180, %v2339
        %v2341 = vpop.f32.mrb[0].mxu0
        %2342 = vmatprep.mubr.bf16.mxu0 %v2136
        %2343 = vmatmul.mubr.bf16.gmra.mrb[0].mxu0 %v2135
        %v2344 = vpop.f32.mrb[0].mxu0
        %v2345 = vadd.f32 %v2180, %v2344
        %v2346 = vpop.f32.mrb[0].mxu0
        %v2347 = vpop.f32.mrb[0].mxu0
        %v2348 = vadd.f32 %v2180, %v2347
        %v2349 = vpop.f32.mrb[0].mxu0
        %2350 = vmatprep.mubr.bf16.mxu0 %v2138
        %2351 = vmatmul.mubr.bf16.gmra.mrb[0].mxu0 %v2137
        %v2352 = vpop.f32.mrb[0].mxu0
        %v2353 = vadd.f32 %v2180, %v2352
        %v2354 = vpop.f32.mrb[0].mxu0
        %v2355 = vpop.f32.mrb[0].mxu0
        %v2356 = vadd.f32 %v2180, %v2355
        %v2357 = vpop.f32.mrb[0].mxu0
        %2358 = vmatprep.mubr.bf16.mxu0 %v2140
        %2359 = vmatmul.mubr.bf16.gmra.mrb[0].mxu0 %v2139
        %v2360 = vpop.f32.mrb[0].mxu0
        %v2361 = vadd.f32 %v2180, %v2360
        %v2362 = vpop.f32.mrb[0].mxu0
        %v2363 = vpop.f32.mrb[0].mxu0
        %v2364 = vadd.f32 %v2180, %v2363
        %v2365 = vpop.f32.mrb[0].mxu0
        %2366 = vmatprep.mubr.bf16.mxu0 %v2142
        %2367 = vmatmul.mubr.bf16.gmra.mrb[0].mxu0 %v2141
        %v2368 = vpop.f32.mrb[0].mxu0
        %v2369 = vadd.f32 %v2180, %v2368
        %v2370 = vpop.f32.mrb[0].mxu0
        %v2371 = vpop.f32.mrb[0].mxu0
        %v2372 = vadd.f32 %v2180, %v2371
        %v2373 = vpop.f32.mrb[0].mxu0
        %2374 = vdwg.mxu0
        %v2375 = vmax.f32 %v2313, 0.0
        %v2376 = vmax.f32 %v2316, 0.0
        %v2377 = vmax.f32 %v2321, 0.0
        %v2378 = vmax.f32 %v2324, 0.0
        %v2379 = vmax.f32 %v2329, 0.0
        %v2380 = vmax.f32 %v2332, 0.0
        %v2381 = vmax.f32 %v2337, 0.0
        %v2382 = vmax.f32 %v2340, 0.0
        %v2383 = vmax.f32 %v2345, 0.0
        %v2384 = vmax.f32 %v2348, 0.0
        %v2385 = vmax.f32 %v2353, 0.0
        %v2386 = vmax.f32 %v2356, 0.0
        %v2387 = vmax.f32 %v2361, 0.0
        %v2388 = vmax.f32 %v2364, 0.0
        %v2389 = vmax.f32 %v2369, 0.0
        %v2390 = vmax.f32 %v2372, 0.0
        %v2391 = vpack.c.bf16 %v2376, %v2375
        %v2392 = vpack.c.bf16 %v2378, %v2377
        %v2393 = vpack.c.bf16 %v2380, %v2379
        %v2394 = vpack.c.bf16 %v2382, %v2381
        %v2395 = vpack.c.bf16 %v2384, %v2383
        %v2396 = vpack.c.bf16 %v2386, %v2385
        %v2397 = vpack.c.bf16 %v2388, %v2387
        %v2398 = vpack.c.bf16 %v2390, %v2389
        %v2399 = vld [vmem:[%s18] sm:$0xf]
        %v2400 = vld [vmem:[%s18 + $0x4] sm:$0xf]
        %v2401 = vld [vmem:[%s18 + $0x8] sm:$0xf]
        %v2402 = vld [vmem:[%s18 + $0xc] sm:$0xf]
        %v2403 = vld [vmem:[%s18 + $0x10] sm:$0xf]
        %v2404 = vld [vmem:[%s18 + $0x14] sm:$0xf]
        %v2405 = vld [vmem:[%s18 + $0x18] sm:$0xf]
        %v2406 = vld [vmem:[%s18 + $0x1c] sm:$0xf]
        %v2407 = vld [vmem:[%s18 + $0x20] sm:$0xf]
        %v2408 = vld [vmem:[%s18 + $0x24] sm:$0xf]
        %v2409 = vld [vmem:[%s18 + $0x28] sm:$0xf]
        %v2410 = vld [vmem:[%s18 + $0x2c] sm:$0xf]
        %v2411 = vld [vmem:[%s18 + $0x30] sm:$0xf]
        %v2412 = vld [vmem:[%s18 + $0x34] sm:$0xf]
        %v2413 = vld [vmem:[%s18 + $0x38] sm:$0xf]
        %v2414 = vld [vmem:[%s18 + $0x3c] sm:$0xf]
        %v2415 = vld [vmem:[%s19] sm:$0x1]
        %v2417 = vlaneseq
        %v2418 = vshrl.u32 %v2417, 7
        %v2419 = vsub.s32 0, %v2418
        %v2420 = vrot.slane %v2415, %v2419
        %v2438 = vunpack.c.l.b16 %v2399
        %v2439 = vunpack.c.l.b16 %v2400
        %v2440 = vunpack.c.l.b16 %v2401
        %v2441 = vunpack.c.l.b16 %v2402
        %v2442 = vunpack.c.l.b16 %v2403
        %v2443 = vunpack.c.l.b16 %v2404
        %v2444 = vunpack.c.l.b16 %v2405
        %v2445 = vunpack.c.l.b16 %v2406
        %v2446 = vunpack.c.l.b16 %v2407
        %v2447 = vunpack.c.l.b16 %v2408
        %v2448 = vunpack.c.l.b16 %v2409
        %v2449 = vunpack.c.l.b16 %v2410
        %v2450 = vunpack.c.l.b16 %v2411
        %v2451 = vunpack.c.l.b16 %v2412
        %v2452 = vunpack.c.l.b16 %v2413
        %v2453 = vunpack.c.l.b16 %v2414
        %v2454 = vpack.c.b16 %v2439, %v2438
        %v2455 = vpack.c.b16 %v2441, %v2440
        %v2456 = vpack.c.b16 %v2443, %v2442
        %v2457 = vpack.c.b16 %v2445, %v2444
        %v2458 = vpack.c.b16 %v2447, %v2446
        %v2459 = vpack.c.b16 %v2449, %v2448
        %v2460 = vpack.c.b16 %v2451, %v2450
        %v2461 = vpack.c.b16 %v2453, %v2452
        %2470 = vmatprep.subr.bf16.mxu0 0
        %2471 = vmatpush1.bf16.msra.mxu0 %v2454
        %2472 = vmatprep.subr.bf16.mxu0 0
        %2473 = vmatpush1.bf16.msra.mxu0 %v2455
        %2474 = vmatprep.subr.bf16.mxu0 0
        %2475 = vmatpush1.bf16.msra.mxu0 %v2456
        %2476 = vmatprep.subr.bf16.mxu0 0
        %2477 = vmatpush1.bf16.msra.mxu0 %v2457
        %2478 = vmatprep.subr.bf16.mxu0 0
        %2479 = vmatpush1.bf16.msra.mxu0 %v2458
        %2480 = vmatprep.subr.bf16.mxu0 0
        %2481 = vmatpush1.bf16.msra.mxu0 %v2459
        %2482 = vmatprep.subr.bf16.mxu0 0
        %2483 = vmatpush1.bf16.msra.mxu0 %v2460
        %2484 = vmatprep.subr.bf16.mxu0 0
        %2485 = vmatpush1.bf16.msra.mxu0 %v2461
        %2486 = vmatprep.subr.bf16.mxu0 0
        %2487 = vmatpush1.bf16.msra.mxu0 0
        %2488 = vmatprep.subr.bf16.mxu0 0
        %2489 = vmatpush1.bf16.msra.mxu0 0
        %2490 = vmatprep.subr.bf16.mxu0 0
        %2491 = vmatpush1.bf16.msra.mxu0 0
        %2492 = vmatprep.subr.bf16.mxu0 0
        %2493 = vmatpush1.bf16.msra.mxu0 0
        %2494 = vmatprep.subr.bf16.mxu0 0
        %2495 = vmatpush1.bf16.msra.mxu0 0
        %2496 = vmatprep.subr.bf16.mxu0 0
        %2497 = vmatpush1.bf16.msra.mxu0 0
        %2498 = vmatprep.subr.bf16.mxu0 0
        %2499 = vmatpush1.bf16.msra.mxu0 0
        %2500 = vmatprep.subr.bf16.mxu0 0
        %2501 = vmatpush1.bf16.msra.mxu0 0
        %2502 = vmatprep.mubr.bf16.mxu0 0
        %2503 = vmatmul.mubr.bf16.gmra.mrb[0].mxu0 %v2391
        %v2504 = vpop.f32.mrb[0].mxu0
        %v2505 = vadd.f32 %v2420, %v2504
        %v2506 = vpop.f32.mrb[0].mxu0
        %v2507 = vpop.f32.mrb[0].mxu0
        %v2508 = vadd.f32 %v2420, %v2507
        %v2509 = vpop.f32.mrb[0].mxu0
        %2510 = vmatprep.mubr.bf16.mxu0 0
        %2511 = vmatmul.mubr.bf16.gmra.mrb[0].mxu0 %v2392
        %v2512 = vpop.f32.mrb[0].mxu0
        %v2513 = vadd.f32 %v2420, %v2512
        %v2514 = vpop.f32.mrb[0].mxu0
        %v2515 = vpop.f32.mrb[0].mxu0
        %v2516 = vadd.f32 %v2420, %v2515
        %v2517 = vpop.f32.mrb[0].mxu0
        %2518 = vmatprep.mubr.bf16.mxu0 0
        %2519 = vmatmul.mubr.bf16.gmra.mrb[0].mxu0 %v2393
        %v2520 = vpop.f32.mrb[0].mxu0
        %v2521 = vadd.f32 %v2420, %v2520
        %v2522 = vpop.f32.mrb[0].mxu0
        %v2523 = vpop.f32.mrb[0].mxu0
        %v2524 = vadd.f32 %v2420, %v2523
        %v2525 = vpop.f32.mrb[0].mxu0
        %2526 = vmatprep.mubr.bf16.mxu0 0
        %2527 = vmatmul.mubr.bf16.gmra.mrb[0].mxu0 %v2394
        %v2528 = vpop.f32.mrb[0].mxu0
        %v2529 = vadd.f32 %v2420, %v2528
        %v2530 = vpop.f32.mrb[0].mxu0
        %v2531 = vpop.f32.mrb[0].mxu0
        %v2532 = vadd.f32 %v2420, %v2531
        %v2533 = vpop.f32.mrb[0].mxu0
        %2534 = vmatprep.mubr.bf16.mxu0 0
        %2535 = vmatmul.mubr.bf16.gmra.mrb[0].mxu0 %v2395
        %v2536 = vpop.f32.mrb[0].mxu0
        %v2537 = vadd.f32 %v2420, %v2536
        %v2538 = vpop.f32.mrb[0].mxu0
        %v2539 = vpop.f32.mrb[0].mxu0
        %v2540 = vadd.f32 %v2420, %v2539
        %v2541 = vpop.f32.mrb[0].mxu0
        %2542 = vmatprep.mubr.bf16.mxu0 0
        %2543 = vmatmul.mubr.bf16.gmra.mrb[0].mxu0 %v2396
        %v2544 = vpop.f32.mrb[0].mxu0
        %v2545 = vadd.f32 %v2420, %v2544
        %v2546 = vpop.f32.mrb[0].mxu0
        %v2547 = vpop.f32.mrb[0].mxu0
        %v2548 = vadd.f32 %v2420, %v2547
        %v2549 = vpop.f32.mrb[0].mxu0
        %2550 = vmatprep.mubr.bf16.mxu0 0
        %2551 = vmatmul.mubr.bf16.gmra.mrb[0].mxu0 %v2397
        %v2552 = vpop.f32.mrb[0].mxu0
        %v2553 = vadd.f32 %v2420, %v2552
        %v2554 = vpop.f32.mrb[0].mxu0
        %v2555 = vpop.f32.mrb[0].mxu0
        %v2556 = vadd.f32 %v2420, %v2555
        %v2557 = vpop.f32.mrb[0].mxu0
        %2558 = vmatprep.mubr.bf16.mxu0 0
        %2559 = vmatmul.mubr.bf16.gmra.mrb[0].mxu0 %v2398
        %v2560 = vpop.f32.mrb[0].mxu0
        %v2561 = vadd.f32 %v2420, %v2560
        %v2562 = vpop.f32.mrb[0].mxu0
        %v2563 = vpop.f32.mrb[0].mxu0
        %v2564 = vadd.f32 %v2420, %v2563
        %v2565 = vpop.f32.mrb[0].mxu0
        %2566 = vdwg.mxu0
        %2567 = vst.msk [vmem:[%s767] sm:$0xff] %vm777, %v2505
        %2568 = vst.msk [vmem:[%s767 + $0x8] sm:$0xff] %vm777, %v2508
        %2569 = vst.msk [vmem:[%s767 + $0x10] sm:$0xff] %vm777, %v2513
        %2570 = vst.msk [vmem:[%s767 + $0x18] sm:$0xff] %vm777, %v2516
        %2571 = vst.msk [vmem:[%s767 + $0x20] sm:$0xff] %vm777, %v2521
        %2572 = vst.msk [vmem:[%s767 + $0x28] sm:$0xff] %vm777, %v2524
        %2573 = vst.msk [vmem:[%s767 + $0x30] sm:$0xff] %vm777, %v2529
        %2574 = vst.msk [vmem:[%s767 + $0x38] sm:$0xff] %vm777, %v2532
        %2575 = vst.msk [vmem:[%s767 + $0x40] sm:$0xff] %vm777, %v2537
        %2576 = vst.msk [vmem:[%s767 + $0x48] sm:$0xff] %vm777, %v2540
        %2577 = vst.msk [vmem:[%s767 + $0x50] sm:$0xff] %vm777, %v2545
        %2578 = vst.msk [vmem:[%s767 + $0x58] sm:$0xff] %vm777, %v2548
        %2579 = vst.msk [vmem:[%s767 + $0x60] sm:$0xff] %vm777, %v2553
        %2580 = vst.msk [vmem:[%s767 + $0x68] sm:$0xff] %vm777, %v2556
        %2581 = vst.msk [vmem:[%s767 + $0x70] sm:$0xff] %vm777, %v2561
        %2582 = vst.msk [vmem:[%s767 + $0x78] sm:$0xff] %vm777, %v2564
        %s2583 = smul.u32 16, %s38
        %p2584 = scmp.lt.s32.totalorder %s2583, 31
        %s2585 = scalar_select %p2584, %s2583, 31
        %s2586 = smul.addr %s2585, 8
        %s2587 = scalar_lea.vmem %s20, %s2586
        // Predicated region
        $region137: #{tpu_custom_call.1} parent=99 // pred_check
          %p2588 = pneg %p486
        $region138: #{tpu_custom_call.1} parent=99 // pred_check_branch
          %2590 = sbr.rel (%p2588) target = $region140
        $region139: #{tpu_custom_call.1} parent=99 // pred_region
          %s2591 = smul.u32 16, %s38
        $region140: #{tpu_custom_call.1} parent=99 // pred_fallthru
          _
      $region100: #{tpu_custom_call.1} parent=5 // pred_fallthru
        _
      %p2592 = scmp.le.s32.totalorder 2, %s33
      // Predicated region
      $region141: #{tpu_custom_call.1} parent=5 // pred_check
        %p2593 = pneg %p2592
      $region142: #{tpu_custom_call.1} parent=5 // pred_check_branch
        %2595 = sbr.rel (%p2593) target = $region144
      $region143: #{tpu_custom_call.1} parent=5 // pred_region
        %s2596 = ssub.s32 %s33, 2
        // Predicated region
        $region145: #{tpu_custom_call.1} parent=143 // pred_check
          %p2597 = pneg %p492
        $region146: #{tpu_custom_call.1} parent=143 // pred_check_branch
          %2599 = sbr.rel (%p2597) target = $region148
        $region147: #{tpu_custom_call.1} parent=143 // pred_region
          %s2600 = smul.u32 16, %s39
          %p2601 = scmp.lt.s32.totalorder %s2600, 31
          %s2602 = scalar_select %p2601, %s2600, 31
          %s2603 = smul.addr %s2602, 8
          %s2604 = scalar_lea.vmem %s20, %s2603
        $region148: #{tpu_custom_call.1} parent=143 // pred_fallthru
          _
      $region144: #{tpu_custom_call.1} parent=5 // pred_fallthru
        _
    $region6: #{tpu_custom_call.1} parent=1 // loop_footer
      %s37 = sadd.s32 1, %s33
    $region7: #{tpu_custom_call.1} parent=1 // loop_footer_branch
      %32 = sbr.rel target = $region3
    $region8: #{tpu_custom_call.1} parent=1 // loop_exit
      _
    %2605 = vsyncpa [#allocation3], 1
    %s2606 = scalar_lea.sflag [#allocation3], 1
    %2607 = vsyncpa %s2606, 1
    %2608 = vsyncpa [#allocation5], 1
    %2609 = vsyncpa [#allocation8], 1
    %2610 = vsyncpa [#allocation11], 1
    %2611 = vsyncpa [#allocation14], 1

</llo_original>
